<compile_context>
chip_gen: v6e
topology: v6e:2x2x1
jax: 0.10.0
libtpu: 0.0.40
codegen_flags: <defaults>
</compile_context>

<pallas_src>
import functools

import jax
import jax.numpy as jnp
from jax.experimental import pallas as pl
from jax.experimental.pallas import tpu as pltpu


def _mlp_kernel(z_ref, c_ref, w1z_ref, w1c_ref, b1_ref, w2_ref, b2_ref, o_ref):
    """Fused: (z@W1z + c@W1c + b1) -> LeakyReLU -> (@W2 + b2) -> Tanh."""
    # First layer: concat folded into two dots accumulating in f32.
    h = jnp.dot(z_ref[...], w1z_ref[...], preferred_element_type=jnp.float32)
    h = h + jnp.dot(c_ref[...], w1c_ref[...], preferred_element_type=jnp.float32)
    h = h + b1_ref[...]                               # (bm, H), f32
    h = jnp.where(h > 0, h, 0.01 * h)                 # LeakyReLU(0.01), f32 VPU
    # Second layer: downcast only the MXU operand, accumulate in f32.
    y = jnp.dot(h.astype(w2_ref.dtype), w2_ref[...],
                preferred_element_type=jnp.float32)
    y = y + b2_ref[...]                               # (bm, X), f32
    o_ref[...] = jnp.tanh(y).astype(o_ref.dtype)      # EUP tanh, f32


def _pick_block_b(B, z_dim, att_dim, X, compute_itemsize):
    """Batch tile: multiple of 8 rows, >=2 grid steps when possible, VMEM-bounded."""
    # Double-buffered activation bytes per row (z + c tiles in compute dtype,
    # output tile in f32).
    per_row = 2 * ((z_dim + att_dim) * compute_itemsize + X * 4)
    budget = 8 * 1024 * 1024                 # ~8 MiB for streamed activation tiles
    max_rows = max(8, budget // max(per_row, 1))
    if B >= 512:
        block_b = 256                        # fills MXU M on v6e/v7x, >=2 steps
    else:
        block_b = max(8, ((B + 1) // 2 // 8) * 8)   # aim for 2 grid steps
    block_b = int(min(block_b, max_rows))
    return max(8, (block_b // 8) * 8)


def netG_att_forward(z, c, params, *, block_b=None, compute_dtype=jnp.bfloat16):
    """Pallas forward of _netG_att. z: (B, z_dim), c: (B, att_dim)."""
    w1, b1, w2, b2 = params
    B, z_dim = z.shape
    att_dim = c.shape[1]
    D_in = z_dim + att_dim
    H = w1.shape[1]
    X = w2.shape[1]
    itemsize = jnp.dtype(compute_dtype).itemsize

    if block_b is None:
        block_b = _pick_block_b(B, z_dim, att_dim, X, itemsize)
    block_b = min(block_b, max(8, B)) if B >= 8 else 8

    # Pad batch to a multiple of block_b (padded rows are computed then dropped).
    n_blocks = pl.cdiv(B, block_b)
    B_pad = n_blocks * block_b
    if B_pad != B:
        pad = B_pad - B
        z = jnp.pad(z, ((0, pad), (0, 0)))
        c = jnp.pad(c, ((0, pad), (0, 0)))

    # Split W1 so the concat never materializes; cast MXU operands to bf16.
    w1z = w1[:z_dim].astype(compute_dtype)
    w1c = w1[z_dim:].astype(compute_dtype)
    w2_c = w2.astype(compute_dtype)
    z_c = z.astype(compute_dtype)
    c_c = c.astype(compute_dtype)
    b1_2d = b1.reshape(1, H).astype(jnp.float32)
    b2_2d = b2.reshape(1, X).astype(jnp.float32)

    # Explicit VMEM cap: double-buffered activation tiles + (double-buffered)
    # resident weights + headroom, clamped under v7x's 64 MiB physical VMEM.
    vmem_bytes = (
        2 * block_b * (z_dim + att_dim) * itemsize      # z/c input tiles
        + 2 * block_b * X * 4                           # f32 output tiles
        + 2 * (D_in * H + H * X) * itemsize             # weights
        + 2 * (H + X) * 4                               # biases
    )
    vmem_limit = int(min(vmem_bytes * 2 + (8 << 20), 48 << 20))

    grid = (n_blocks,)
    out = pl.pallas_call(
        _mlp_kernel,
        out_shape=jax.ShapeDtypeStruct((B_pad, X), jnp.float32),
        grid_spec=pltpu.PrefetchScalarGridSpec(
            num_scalar_prefetch=0,
            grid=grid,
            in_specs=[
                pl.BlockSpec((block_b, z_dim), lambda i: (i, 0)),    # z tile
                pl.BlockSpec((block_b, att_dim), lambda i: (i, 0)),  # c tile
                pl.BlockSpec((z_dim, H), lambda i: (0, 0)),          # W1[:z]  (resident)
                pl.BlockSpec((att_dim, H), lambda i: (0, 0)),        # W1[z:]  (resident)
                pl.BlockSpec((1, H), lambda i: (0, 0)),              # b1
                pl.BlockSpec((H, X), lambda i: (0, 0)),              # W2      (resident)
                pl.BlockSpec((1, X), lambda i: (0, 0)),              # b2
            ],
            out_specs=pl.BlockSpec((block_b, X), lambda i: (i, 0)),
        ),
        compiler_params=pltpu.CompilerParams(
            dimension_semantics=("parallel",),
            vmem_limit_bytes=vmem_limit,
        ),
    )(z_c, c_c, w1z, w1c, b1_2d, w2_c, b2_2d)
    return out[:B]


def init_params(key, d_in, h_dim, x_dim, dtype=jnp.float32):
    """Deterministic synthetic parameters (PyTorch Linear-like uniform init).

    Weights stored pre-transposed as (in_features, out_features)."""
    k1, k2, k3, k4 = jax.random.split(key, 4)
    lim1 = 1.0 / jnp.sqrt(d_in)
    lim2 = 1.0 / jnp.sqrt(h_dim)
    w1 = jax.random.uniform(k1, (d_in, h_dim), dtype, -lim1, lim1)
    b1 = jax.random.uniform(k2, (h_dim,), dtype, -lim1, lim1)
    w2 = jax.random.uniform(k3, (h_dim, x_dim), dtype, -lim2, lim2)
    b2 = jax.random.uniform(k4, (x_dim,), dtype, -lim2, lim2)
    return w1, b1, w2, b2


def reference_forward_f32(z, c, params):
    """Pure-JAX f32 reference matching the PyTorch semantics."""
    w1, b1, w2, b2 = params
    x = jnp.concatenate([z, c], axis=1)
    h = x @ w1 + b1
    h = jnp.where(h > 0, h, 0.01 * h)
    y = h @ w2 + b2
    return jnp.tanh(y)


def reference_forward_bf16(z, c, params):
    """Pure-JAX reference emulating the kernel's bf16-operand / f32-accum dots."""
    w1, b1, w2, b2 = params
    z_dim = z.shape[1]
    zb = z.astype(jnp.bfloat16)
    cb = c.astype(jnp.bfloat16)
    w1b = w1.astype(jnp.bfloat16)
    w2b = w2.astype(jnp.bfloat16)
    h = (jnp.dot(zb, w1b[:z_dim], preferred_element_type=jnp.float32)
         + jnp.dot(cb, w1b[z_dim:], preferred_element_type=jnp.float32)
         + b1.astype(jnp.float32))
    h = jnp.where(h > 0, h, 0.01 * h)
    y = (jnp.dot(h.astype(jnp.bfloat16), w2b, preferred_element_type=jnp.float32)
         + b2.astype(jnp.float32))
    return jnp.tanh(y)


if __name__ == "__main__":
    # Small shapes consistent with the module (opt.z_dim=16, att_dim=16), with a
    # batch large enough to exercise multi-tile pipelining (2 x 256-row tiles).
    B, Z_DIM, ATT_DIM, H_DIM, X_DIM = 512, 16, 16, 256, 512

    key = jax.random.PRNGKey(0)
    kz, kc, kp = jax.random.split(key, 3)
    z = jax.random.normal(kz, (B, Z_DIM), jnp.float32)
    c = jax.random.normal(kc, (B, ATT_DIM), jnp.float32)
    params = init_params(kp, Z_DIM + ATT_DIM, H_DIM, X_DIM)

    fwd = jax.jit(functools.partial(netG_att_forward, block_b=None))
    out = jax.block_until_ready(fwd(z, c, params))

    ref_bf16 = reference_forward_bf16(z, c, params)
    ref_f32 = reference_forward_f32(z, c, params)

    assert out.shape == (B, X_DIM)
    assert jnp.all(jnp.isfinite(out)), "non-finite output"
    # Tight check against a reference using the same bf16-operand math.
    assert jnp.allclose(out, ref_bf16, atol=5e-3, rtol=5e-3), \
        "mismatch vs bf16-emulating reference"
    # Looser check against the full-f32 PyTorch-equivalent semantics.
    assert jnp.allclose(out, ref_f32, atol=5e-2, rtol=5e-2), \
        "mismatch vs f32 reference"

    print("KERNEL_OK")
</pallas_src>

<mosaic_0001>
module attributes {stable_mosaic.version = 11 : i64} {
  func.func @_mlp_kernel(%arg0: i32, %arg1: memref<256x16xbf16, #tpu.memory_space<vmem>>, %arg2: memref<256x16xbf16, #tpu.memory_space<vmem>>, %arg3: memref<16x256xbf16, #tpu.memory_space<vmem>>, %arg4: memref<16x256xbf16, #tpu.memory_space<vmem>>, %arg5: memref<1x256xf32, #tpu.memory_space<vmem>>, %arg6: memref<256x512xbf16, #tpu.memory_space<vmem>>, %arg7: memref<1x512xf32, #tpu.memory_space<vmem>>, %arg8: memref<256x512xf32, #tpu.memory_space<vmem>>) attributes {dimension_semantics = [#tpu.dimension_semantics<parallel>], iteration_bounds = array<i64: 2>, scalar_prefetch = 0 : i64, scratch_operands = 0 : i64, tpu.core_type = #tpu.core_type<tc>, window_params = [{transform_indices = @transform_0, window_bounds = array<i64: 256, 16>}, {transform_indices = @transform_1, window_bounds = array<i64: 256, 16>}, {pipeline_mode = #tpu.pipeline_mode<synchronous>, transform_indices = @transform_2, window_bounds = array<i64: 16, 256>}, {pipeline_mode = #tpu.pipeline_mode<synchronous>, transform_indices = @transform_3, window_bounds = array<i64: 16, 256>}, {pipeline_mode = #tpu.pipeline_mode<synchronous>, transform_indices = @transform_4, window_bounds = array<i64: 1, 256>}, {pipeline_mode = #tpu.pipeline_mode<synchronous>, transform_indices = @transform_5, window_bounds = array<i64: 256, 512>}, {pipeline_mode = #tpu.pipeline_mode<synchronous>, transform_indices = @transform_6, window_bounds = array<i64: 1, 512>}, {transform_indices = @transform_7, window_bounds = array<i64: 256, 512>}]} {
    %c0 = arith.constant 0 : index
    %c0_0 = arith.constant 0 : index
    %0 = vector.load %arg1[%c0, %c0_0] : memref<256x16xbf16, #tpu.memory_space<vmem>>, vector<256x16xbf16>
    %c0_1 = arith.constant 0 : index
    %c0_2 = arith.constant 0 : index
    %1 = vector.load %arg3[%c0_1, %c0_2] : memref<16x256xbf16, #tpu.memory_space<vmem>>, vector<16x256xbf16>
    %cst = arith.constant dense<0.000000e+00> : vector<256x256xf32>
    %2 = tpu.matmul %0, %1, %cst {dimension_numbers = #tpu.dot_dimension_numbers<[1], [0], [0], [1], [0, 0, 1, 1], [], []>} : vector<256x16xbf16>, vector<16x256xbf16>, vector<256x256xf32> -> vector<256x256xf32>
    %c0_3 = arith.constant 0 : index
    %c0_4 = arith.constant 0 : index
    %3 = vector.load %arg2[%c0_3, %c0_4] : memref<256x16xbf16, #tpu.memory_space<vmem>>, vector<256x16xbf16>
    %c0_5 = arith.constant 0 : index
    %c0_6 = arith.constant 0 : index
    %4 = vector.load %arg4[%c0_5, %c0_6] : memref<16x256xbf16, #tpu.memory_space<vmem>>, vector<16x256xbf16>
    %cst_7 = arith.constant dense<0.000000e+00> : vector<256x256xf32>
    %5 = tpu.matmul %3, %4, %cst_7 {dimension_numbers = #tpu.dot_dimension_numbers<[1], [0], [0], [1], [0, 0, 1, 1], [], []>} : vector<256x16xbf16>, vector<16x256xbf16>, vector<256x256xf32> -> vector<256x256xf32>
    %6 = arith.addf %2, %5 : vector<256x256xf32>
    %c0_8 = arith.constant 0 : index
    %c0_9 = arith.constant 0 : index
    %7 = vector.load %arg5[%c0_8, %c0_9] : memref<1x256xf32, #tpu.memory_space<vmem>>, vector<1x256xf32>
    %8 = vector.broadcast %7 : vector<1x256xf32> to vector<256x256xf32>
    %9 = arith.addf %6, %8 : vector<256x256xf32>
    %cst_10 = arith.constant 0.000000e+00 : f32
    %10 = vector.broadcast %cst_10 : f32 to vector<256x256xf32>
    %11 = arith.cmpf ogt, %9, %10 : vector<256x256xf32>
    %cst_11 = arith.constant 0.00999999977 : f32
    %12 = vector.broadcast %cst_11 : f32 to vector<256x256xf32>
    %13 = arith.mulf %12, %9 : vector<256x256xf32>
    %14 = arith.select %11, %9, %13 : vector<256x256xi1>, vector<256x256xf32>
    %15 = arith.truncf %14 : vector<256x256xf32> to vector<256x256xbf16>
    %c0_12 = arith.constant 0 : index
    %c0_13 = arith.constant 0 : index
    %16 = vector.load %arg6[%c0_12, %c0_13] : memref<256x512xbf16, #tpu.memory_space<vmem>>, vector<256x512xbf16>
    %cst_14 = arith.constant dense<0.000000e+00> : vector<256x512xf32>
    %17 = tpu.matmul %15, %16, %cst_14 {dimension_numbers = #tpu.dot_dimension_numbers<[1], [0], [0], [1], [0, 0, 1, 1], [], []>} : vector<256x256xbf16>, vector<256x512xbf16>, vector<256x512xf32> -> vector<256x512xf32>
    %c0_15 = arith.constant 0 : index
    %c0_16 = arith.constant 0 : index
    %18 = vector.load %arg7[%c0_15, %c0_16] : memref<1x512xf32, #tpu.memory_space<vmem>>, vector<1x512xf32>
    %19 = vector.broadcast %18 : vector<1x512xf32> to vector<256x512xf32>
    %20 = arith.addf %17, %19 : vector<256x512xf32>
    %21 = math.tanh %20 : vector<256x512xf32>
    %c0_17 = arith.constant 0 : index
    %c0_18 = arith.constant 0 : index
    %22 = vector.load %arg8[%c0_17, %c0_18] : memref<256x512xf32, #tpu.memory_space<vmem>>, vector<256x512xf32>
    tpu.vector_store %arg8[%c0_17, %c0_18], %21 {strides = array<i32>} : memref<256x512xf32, #tpu.memory_space<vmem>>, vector<256x512xf32>,
    return
  }
  func.func @transform_0(%arg0: i32) -> (i32, i32) {
    %c0_i32 = arith.constant 0 : i32
    %c0_i32_0 = arith.constant 0 : i32
    return %arg0, %c0_i32 : i32, i32
  }
  func.func @transform_1(%arg0: i32) -> (i32, i32) {
    %c0_i32 = arith.constant 0 : i32
    %c0_i32_0 = arith.constant 0 : i32
    return %arg0, %c0_i32 : i32, i32
  }
  func.func @transform_2(%arg0: i32) -> (i32, i32) {
    %c0_i32 = arith.constant 0 : i32
    %c0_i32_0 = arith.constant 0 : i32
    %c0_i32_1 = arith.constant 0 : i32
    return %c0_i32, %c0_i32_0 : i32, i32
  }
  func.func @transform_3(%arg0: i32) -> (i32, i32) {
    %c0_i32 = arith.constant 0 : i32
    %c0_i32_0 = arith.constant 0 : i32
    %c0_i32_1 = arith.constant 0 : i32
    return %c0_i32, %c0_i32_0 : i32, i32
  }
  func.func @transform_4(%arg0: i32) -> (i32, i32) {
    %c0_i32 = arith.constant 0 : i32
    %c0_i32_0 = arith.constant 0 : i32
    %c0_i32_1 = arith.constant 0 : i32
    return %c0_i32, %c0_i32_0 : i32, i32
  }
  func.func @transform_5(%arg0: i32) -> (i32, i32) {
    %c0_i32 = arith.constant 0 : i32
    %c0_i32_0 = arith.constant 0 : i32
    %c0_i32_1 = arith.constant 0 : i32
    return %c0_i32, %c0_i32_0 : i32, i32
  }
  func.func @transform_6(%arg0: i32) -> (i32, i32) {
    %c0_i32 = arith.constant 0 : i32
    %c0_i32_0 = arith.constant 0 : i32
    %c0_i32_1 = arith.constant 0 : i32
    return %c0_i32, %c0_i32_0 : i32, i32
  }
  func.func @transform_7(%arg0: i32) -> (i32, i32) {
    %c0_i32 = arith.constant 0 : i32
    %c0_i32_0 = arith.constant 0 : i32
    return %arg0, %c0_i32 : i32, i32
  }
}

</mosaic_0001>

<llo_original>
// kernel: netG_att_forward.1
$region0: #{netG_att_forward.1}
  #allocation0 [shape = 'u32[]', space=smem, size = 0x4, offset = 0x4, fixed_abs, tag = 'smem constant byte address 0x4 - core index']
  #allocation1 [shape = 'u32[144,128]{1,0:T(1,128)}', space=vmem, size = 0x12000, scoped, tag = 'internal scratch']
  %s0 = inlined_call_operand.vmem [shape: bf16[512,16], index: 0, kind: input, shape index: {}]
  %s1 = inlined_call_operand.vmem [shape: bf16[512,16], index: 1, kind: input, shape index: {}]
  %s2 = inlined_call_operand.vmem [shape: bf16[16,256], index: 2, kind: input, shape index: {}]
  %s3 = inlined_call_operand.vmem [shape: bf16[16,256], index: 3, kind: input, shape index: {}]
  %s4 = inlined_call_operand.vmem [shape: f32[1,256], index: 4, kind: input, shape index: {}]
  %s5 = inlined_call_operand.vmem [shape: bf16[256,512], index: 5, kind: input, shape index: {}]
  %s6 = inlined_call_operand.vmem [shape: f32[1,512], index: 6, kind: input, shape index: {}]
  %s7 = inlined_call_operand.hbm [shape: f32[512,512], index: 7, kind: output, shape index: {}]
  %s8 = sld [smem:[#allocation0]]
  $region61: #{netG_att_forward.1} parent=0
    _
  %s10 = ssub.s32 1, %s8
  %s11 = scalar_select 0, %s10, %s8
  $region1: #{netG_att_forward.1} parent=0
    #allocation2 [shape = 'u8[1048576]{0}', space=vmem, size = 0x100000, scoped, tag = 'output window, operand 0']
    #allocation3 [shape = 's32[2]{0}', space=sflag, size = 0x8, scoped, tag = 'scoped memory for netG_att_forward.1']
    %12 = vsyncpa [#allocation3], 0
    %s13 = scalar_lea.sflag [#allocation3], 1
    %14 = vsyncpa %s13, 0
    loop: start=0, step=1, limit=4
    $region2: #{netG_att_forward.1} parent=1 // loop_pre_header
      _
    $region3: #{netG_att_forward.1} parent=1 // loop_header
      %s16 = sphi 0, %s20
      %p17 = scmp.ge.s32.totalorder %s16, 4
      %s26 = sphi 0, %s28
      %s29 = sphi 0, %s26
      %s30 = sphi 0, %s29
      %s46 = sphi 0, %s30
      %s52 = sphi 0, %s54
      %s55 = sphi 0, %s52
      %s56 = sphi 0, %s55
      %s72 = sphi 0, %s56
      %s76 = sphi 0, %s76
      %s78 = sphi 0, %s76
      %s79 = sphi 0, %s78
      %s93 = sphi 0, %s79
      %s97 = sphi 0, %s97
      %s99 = sphi 0, %s97
      %s100 = sphi 0, %s99
      %s114 = sphi 0, %s100
      %s118 = sphi 0, %s118
      %s120 = sphi 0, %s118
      %s121 = sphi 0, %s120
      %s135 = sphi 0, %s121
      %s139 = sphi 0, %s139
      %s141 = sphi 0, %s139
      %s142 = sphi 0, %s141
      %s156 = sphi 0, %s142
      %s160 = sphi 0, %s160
      %s162 = sphi 0, %s160
      %s163 = sphi 0, %s162
      %s177 = sphi 0, %s163
      %s183 = sphi 0, %s185
      %s186 = sphi 0, %s183
      %s187 = sphi 0, %s186
      %s203 = sphi 0, %s187
    $region4: #{netG_att_forward.1} parent=1 // loop_header_branch
      %19 = sbr.rel (%p17) target = $region8
    $region5: #{netG_att_forward.1} parent=1 // loop_body
      %s21 = ssub.s32 %s16, 1
      %s22 = ssub.s32 %s16, 2
      %s23 = sadd.s32 %s16, 1
      %s24 = ssub.s32 %s16, %s23
      %p25 = scmp.eq.s32.totalorder %s24, 0
      %s27 = sadd.s32 %s26, 1
      %s28 = scalar_select %p25, %s26, %s27
      %p31 = pneg %p25
      %p32 = scmp.eq.s32.totalorder %s16, 1
      %p33 = por %p31, %p32
      %p34 = scmp.ne.s32.totalorder %s26, %s29
      %p35 = scmp.eq.s32.totalorder %s16, 0
      %p36 = por %p34, %p35
      %p37 = scmp.ne.s32.totalorder %s26, %s29
      %p38 = scmp.eq.s32.totalorder %s21, 1
      %p39 = por %p37, %p38
      %p40 = scmp.ne.s32.totalorder %s29, %s30
      %p41 = scmp.eq.s32.totalorder %s21, 0
      %p42 = por %p40, %p41
      %p43 = scmp.ne.s32.totalorder %s29, %s30
      %p44 = scmp.eq.s32.totalorder %s22, 1
      %p45 = por %p43, %p44
      %p47 = scmp.ne.s32.totalorder %s30, %s46
      %p48 = scmp.eq.s32.totalorder %s22, 0
      %p49 = por %p47, %p48
      %s50 = ssub.s32 %s16, %s23
      %p51 = scmp.eq.s32.totalorder %s50, 0
      %s53 = sadd.s32 %s52, 1
      %s54 = scalar_select %p51, %s52, %s53
      %p57 = pneg %p51
      %p58 = scmp.eq.s32.totalorder %s16, 1
      %p59 = por %p57, %p58
      %p60 = scmp.ne.s32.totalorder %s52, %s55
      %p61 = scmp.eq.s32.totalorder %s16, 0
      %p62 = por %p60, %p61
      %p63 = scmp.ne.s32.totalorder %s52, %s55
      %p64 = scmp.eq.s32.totalorder %s21, 1
      %p65 = por %p63, %p64
      %p66 = scmp.ne.s32.totalorder %s55, %s56
      %p67 = scmp.eq.s32.totalorder %s21, 0
      %p68 = por %p66, %p67
      %p69 = scmp.ne.s32.totalorder %s55, %s56
      %p70 = scmp.eq.s32.totalorder %s22, 1
      %p71 = por %p69, %p70
      %p73 = scmp.ne.s32.totalorder %s56, %s72
      %p74 = scmp.eq.s32.totalorder %s22, 0
      %p75 = por %p73, %p74
      %s77 = sadd.s32 %s76, 1
      %p80 = scmp.eq.s32.totalorder %s16, 1
      %p81 = scmp.ne.s32.totalorder %s76, %s78
      %p82 = scmp.eq.s32.totalorder %s16, 0
      %p83 = por %p81, %p82
      %p84 = scmp.ne.s32.totalorder %s76, %s78
      %p85 = scmp.eq.s32.totalorder %s21, 1
      %p86 = por %p84, %p85
      %p87 = scmp.ne.s32.totalorder %s78, %s79
      %p88 = scmp.eq.s32.totalorder %s21, 0
      %p89 = por %p87, %p88
      %p90 = scmp.ne.s32.totalorder %s78, %s79
      %p91 = scmp.eq.s32.totalorder %s22, 1
      %p92 = por %p90, %p91
      %p94 = scmp.ne.s32.totalorder %s79, %s93
      %p95 = scmp.eq.s32.totalorder %s22, 0
      %p96 = por %p94, %p95
      %s98 = sadd.s32 %s97, 1
      %p101 = scmp.eq.s32.totalorder %s16, 1
      %p102 = scmp.ne.s32.totalorder %s97, %s99
      %p103 = scmp.eq.s32.totalorder %s16, 0
      %p104 = por %p102, %p103
      %p105 = scmp.ne.s32.totalorder %s97, %s99
      %p106 = scmp.eq.s32.totalorder %s21, 1
      %p107 = por %p105, %p106
      %p108 = scmp.ne.s32.totalorder %s99, %s100
      %p109 = scmp.eq.s32.totalorder %s21, 0
      %p110 = por %p108, %p109
      %p111 = scmp.ne.s32.totalorder %s99, %s100
      %p112 = scmp.eq.s32.totalorder %s22, 1
      %p113 = por %p111, %p112
      %p115 = scmp.ne.s32.totalorder %s100, %s114
      %p116 = scmp.eq.s32.totalorder %s22, 0
      %p117 = por %p115, %p116
      %s119 = sadd.s32 %s118, 1
      %p122 = scmp.eq.s32.totalorder %s16, 1
      %p123 = scmp.ne.s32.totalorder %s118, %s120
      %p124 = scmp.eq.s32.totalorder %s16, 0
      %p125 = por %p123, %p124
      %p126 = scmp.ne.s32.totalorder %s118, %s120
      %p127 = scmp.eq.s32.totalorder %s21, 1
      %p128 = por %p126, %p127
      %p129 = scmp.ne.s32.totalorder %s120, %s121
      %p130 = scmp.eq.s32.totalorder %s21, 0
      %p131 = por %p129, %p130
      %p132 = scmp.ne.s32.totalorder %s120, %s121
      %p133 = scmp.eq.s32.totalorder %s22, 1
      %p134 = por %p132, %p133
      %p136 = scmp.ne.s32.totalorder %s121, %s135
      %p137 = scmp.eq.s32.totalorder %s22, 0
      %p138 = por %p136, %p137
      %s140 = sadd.s32 %s139, 1
      %p143 = scmp.eq.s32.totalorder %s16, 1
      %p144 = scmp.ne.s32.totalorder %s139, %s141
      %p145 = scmp.eq.s32.totalorder %s16, 0
      %p146 = por %p144, %p145
      %p147 = scmp.ne.s32.totalorder %s139, %s141
      %p148 = scmp.eq.s32.totalorder %s21, 1
      %p149 = por %p147, %p148
      %p150 = scmp.ne.s32.totalorder %s141, %s142
      %p151 = scmp.eq.s32.totalorder %s21, 0
      %p152 = por %p150, %p151
      %p153 = scmp.ne.s32.totalorder %s141, %s142
      %p154 = scmp.eq.s32.totalorder %s22, 1
      %p155 = por %p153, %p154
      %p157 = scmp.ne.s32.totalorder %s142, %s156
      %p158 = scmp.eq.s32.totalorder %s22, 0
      %p159 = por %p157, %p158
      %s161 = sadd.s32 %s160, 1
      %p164 = scmp.eq.s32.totalorder %s16, 1
      %p165 = scmp.ne.s32.totalorder %s160, %s162
      %p166 = scmp.eq.s32.totalorder %s16, 0
      %p167 = por %p165, %p166
      %p168 = scmp.ne.s32.totalorder %s160, %s162
      %p169 = scmp.eq.s32.totalorder %s21, 1
      %p170 = por %p168, %p169
      %p171 = scmp.ne.s32.totalorder %s162, %s163
      %p172 = scmp.eq.s32.totalorder %s21, 0
      %p173 = por %p171, %p172
      %p174 = scmp.ne.s32.totalorder %s162, %s163
      %p175 = scmp.eq.s32.totalorder %s22, 1
      %p176 = por %p174, %p175
      %p178 = scmp.ne.s32.totalorder %s163, %s177
      %p179 = scmp.eq.s32.totalorder %s22, 0
      %p180 = por %p178, %p179
      %s181 = ssub.s32 %s16, %s23
      %p182 = scmp.eq.s32.totalorder %s181, 0
      %s184 = sadd.s32 %s183, 1
      %s185 = scalar_select %p182, %s183, %s184
      %p188 = pneg %p182
      %p189 = scmp.eq.s32.totalorder %s16, 1
      %p190 = por %p188, %p189
      %p191 = scmp.ne.s32.totalorder %s183, %s186
      %p192 = scmp.eq.s32.totalorder %s16, 0
      %p193 = por %p191, %p192
      %p194 = scmp.ne.s32.totalorder %s183, %s186
      %p195 = scmp.eq.s32.totalorder %s21, 1
      %p196 = por %p194, %p195
      %p197 = scmp.ne.s32.totalorder %s186, %s187
      %p198 = scmp.eq.s32.totalorder %s21, 0
      %p199 = por %p197, %p198
      %p200 = scmp.ne.s32.totalorder %s186, %s187
      %p201 = scmp.eq.s32.totalorder %s22, 1
      %p202 = por %p200, %p201
      %p204 = scmp.ne.s32.totalorder %s187, %s203
      %p205 = scmp.eq.s32.totalorder %s22, 0
      %p206 = por %p204, %p205
      %p207 = scmp.le.s32.totalorder 1, %s16
      %p208 = scmp.lt.s32.totalorder %s16, 3
      %p209 = pnand %p207, %p208
      %p210 = pneg %p209
      // Predicated region
      $region9: #{netG_att_forward.1} parent=5 // pred_check
        _
      $region10: #{netG_att_forward.1} parent=5 // pred_check_branch
        %212 = sbr.rel (%p209) target = $region12
      $region11: #{netG_att_forward.1} parent=5 // pred_region
        %s213 = ssub.s32 %s16, 1
        // Predicated region
        $region13: #{netG_att_forward.1} parent=11 // pred_check
          %p214 = pneg %p89
        $region14: #{netG_att_forward.1} parent=11 // pred_check_branch
          %216 = sbr.rel (%p214) target = $region16
        $region15: #{netG_att_forward.1} parent=11 // pred_region
          _
        $region16: #{netG_att_forward.1} parent=11 // pred_fallthru
          _
        // Predicated region
        $region17: #{netG_att_forward.1} parent=11 // pred_check
          %p217 = pneg %p110
        $region18: #{netG_att_forward.1} parent=11 // pred_check_branch
          %219 = sbr.rel (%p217) target = $region20
        $region19: #{netG_att_forward.1} parent=11 // pred_region
          _
        $region20: #{netG_att_forward.1} parent=11 // pred_fallthru
          _
        // Predicated region
        $region21: #{netG_att_forward.1} parent=11 // pred_check
          %p220 = pneg %p131
        $region22: #{netG_att_forward.1} parent=11 // pred_check_branch
          %222 = sbr.rel (%p220) target = $region24
        $region23: #{netG_att_forward.1} parent=11 // pred_region
          _
        $region24: #{netG_att_forward.1} parent=11 // pred_fallthru
          _
        // Predicated region
        $region25: #{netG_att_forward.1} parent=11 // pred_check
          %p223 = pneg %p152
        $region26: #{netG_att_forward.1} parent=11 // pred_check_branch
          %225 = sbr.rel (%p223) target = $region28
        $region27: #{netG_att_forward.1} parent=11 // pred_region
          _
        $region28: #{netG_att_forward.1} parent=11 // pred_fallthru
          _
        // Predicated region
        $region29: #{netG_att_forward.1} parent=11 // pred_check
          %p226 = pneg %p173
        $region30: #{netG_att_forward.1} parent=11 // pred_check_branch
          %228 = sbr.rel (%p226) target = $region32
        $region31: #{netG_att_forward.1} parent=11 // pred_region
          _
        $region32: #{netG_att_forward.1} parent=11 // pred_fallthru
          _
      $region12: #{netG_att_forward.1} parent=5 // pred_fallthru
        _
      %p229 = scmp.lt.s32.totalorder %s16, 2
      // Predicated region
      $region33: #{netG_att_forward.1} parent=5 // pred_check
        %p230 = pneg %p229
      $region34: #{netG_att_forward.1} parent=5 // pred_check_branch
        %232 = sbr.rel (%p230) target = $region36
      $region35: #{netG_att_forward.1} parent=5 // pred_region
        // Predicated region
        $region37: #{netG_att_forward.1} parent=35 // pred_check
          %p233 = pneg %p36
        $region38: #{netG_att_forward.1} parent=35 // pred_check_branch
          %235 = sbr.rel (%p233) target = $region40
        $region39: #{netG_att_forward.1} parent=35 // pred_region
          %s236 = smul.u32 32, %s16
          %p237 = scmp.lt.s32.totalorder %s236, 63
          %s238 = scalar_select %p237, %s236, 63
          %s239 = smul.addr %s238, 4
          %s240 = scalar_lea.vmem %s0, %s239
          %s241 = smul.u32 32, %s16
        $region40: #{netG_att_forward.1} parent=35 // pred_fallthru
          _
        // Predicated region
        $region41: #{netG_att_forward.1} parent=35 // pred_check
          %p242 = pneg %p62
        $region42: #{netG_att_forward.1} parent=35 // pred_check_branch
          %244 = sbr.rel (%p242) target = $region44
        $region43: #{netG_att_forward.1} parent=35 // pred_region
          %s245 = smul.u32 32, %s16
          %p246 = scmp.lt.s32.totalorder %s245, 63
          %s247 = scalar_select %p246, %s245, 63
          %s248 = smul.addr %s247, 4
          %s249 = scalar_lea.vmem %s1, %s248
          %s250 = smul.u32 32, %s16
        $region44: #{netG_att_forward.1} parent=35 // pred_fallthru
          _
      $region36: #{netG_att_forward.1} parent=5 // pred_fallthru
        _
      %p251 = scmp.le.s32.totalorder 1, %s16
      %p252 = scmp.lt.s32.totalorder %s16, 3
      %p253 = pnand %p251, %p252
      %p254 = pneg %p253
      // Predicated region
      $region45: #{netG_att_forward.1} parent=5 // pred_check
        _
      $region46: #{netG_att_forward.1} parent=5 // pred_check_branch
        %256 = sbr.rel (%p253) target = $region48
      $region47: #{netG_att_forward.1} parent=5 // pred_region
        %s257 = ssub.s32 %s16, 1
        %s258 = smul.u32 32, %s21
        %p259 = scmp.lt.s32.totalorder %s258, 63
        %s260 = scalar_select %p259, %s258, 63
        %s261 = smul.addr %s260, 4
        %s262 = scalar_lea.vmem %s0, %s261
        %p263 = pneg %p42
        %p264 = pneg %p39
        %s265 = smul.u32 32, %s21
        %p266 = scmp.lt.s32.totalorder %s265, 63
        %s267 = scalar_select %p266, %s265, 63
        %s268 = smul.addr %s267, 4
        %s269 = scalar_lea.vmem %s1, %s268
        %p270 = pneg %p68
        %p271 = pneg %p65
        %p272 = pneg %p89
        %p273 = pneg %p86
        %p274 = pneg %p110
        %p275 = pneg %p107
        %p276 = pneg %p131
        %p277 = pneg %p128
        %p278 = pneg %p152
        %p279 = pneg %p149
        %p280 = pneg %p173
        %p281 = pneg %p170
        %p282 = pneg %p199
        %p283 = pneg %p196
        %s284 = sand.u32 %s186, 1
        %s285 = scalar_lea.sflag [#allocation3], %s284
        %s286 = sand.u32 %s186, 1
        %s287 = smul.addr %s286, 1024
        %s288 = scalar_lea.vmem [#allocation2], %s287
        %s289 = smul.u32 32, %s21
        %p290 = scmp.lt.s32.totalorder %s289, 63
        %s291 = scalar_select %p290, %s289, 63
        %s292 = smul.addr %s291, 4
        %s293 = scalar_lea.vmem %s0, %s292
        %s294 = smul.u32 32, %s21
        %s295 = smul.u32 32, %s21
        %p296 = scmp.lt.s32.totalorder %s295, 63
        %s297 = scalar_select %p296, %s295, 63
        %s298 = smul.addr %s297, 4
        %s299 = scalar_lea.vmem %s1, %s298
        %s300 = smul.u32 32, %s21
        %s301 = smul.u32 32, %s21
        %v303 = vld [vmem:[%s293] sm:$0xf]
        %v304 = vld [vmem:[%s293 + $0x4] sm:$0xf]
        %v305 = vld [vmem:[%s293 + $0x8] sm:$0xf]
        %v306 = vld [vmem:[%s293 + $0xc] sm:$0xf]
        %v307 = vld [vmem:[%s293 + $0x10] sm:$0xf]
        %v308 = vld [vmem:[%s293 + $0x14] sm:$0xf]
        %v309 = vld [vmem:[%s293 + $0x18] sm:$0xf]
        %v310 = vld [vmem:[%s293 + $0x1c] sm:$0xf]
        %v311 = vld [vmem:[%s293 + $0x20] sm:$0xf]
        %v312 = vld [vmem:[%s293 + $0x24] sm:$0xf]
        %v313 = vld [vmem:[%s293 + $0x28] sm:$0xf]
        %v314 = vld [vmem:[%s293 + $0x2c] sm:$0xf]
        %v315 = vld [vmem:[%s293 + $0x30] sm:$0xf]
        %v316 = vld [vmem:[%s293 + $0x34] sm:$0xf]
        %v317 = vld [vmem:[%s293 + $0x38] sm:$0xf]
        %v318 = vld [vmem:[%s293 + $0x3c] sm:$0xf]
        %v319 = vld [vmem:[%s293 + $0x40] sm:$0xf]
        %v320 = vld [vmem:[%s293 + $0x44] sm:$0xf]
        %v321 = vld [vmem:[%s293 + $0x48] sm:$0xf]
        %v322 = vld [vmem:[%s293 + $0x4c] sm:$0xf]
        %v323 = vld [vmem:[%s293 + $0x50] sm:$0xf]
        %v324 = vld [vmem:[%s293 + $0x54] sm:$0xf]
        %v325 = vld [vmem:[%s293 + $0x58] sm:$0xf]
        %v326 = vld [vmem:[%s293 + $0x5c] sm:$0xf]
        %v327 = vld [vmem:[%s293 + $0x60] sm:$0xf]
        %v328 = vld [vmem:[%s293 + $0x64] sm:$0xf]
        %v329 = vld [vmem:[%s293 + $0x68] sm:$0xf]
        %v330 = vld [vmem:[%s293 + $0x6c] sm:$0xf]
        %v331 = vld [vmem:[%s293 + $0x70] sm:$0xf]
        %v332 = vld [vmem:[%s293 + $0x74] sm:$0xf]
        %v333 = vld [vmem:[%s293 + $0x78] sm:$0xf]
        %v334 = vld [vmem:[%s293 + $0x7c] sm:$0xf]
        %v335 = vld [vmem:[%s2] sm:$0xff]
        %v336 = vld [vmem:[%s2 + $0x8] sm:$0xff]
        %v337 = vld [vmem:[%s299] sm:$0xf]
        %v338 = vld [vmem:[%s299 + $0x4] sm:$0xf]
        %v339 = vld [vmem:[%s299 + $0x8] sm:$0xf]
        %v340 = vld [vmem:[%s299 + $0xc] sm:$0xf]
        %v341 = vld [vmem:[%s299 + $0x10] sm:$0xf]
        %v342 = vld [vmem:[%s299 + $0x14] sm:$0xf]
        %v343 = vld [vmem:[%s299 + $0x18] sm:$0xf]
        %v344 = vld [vmem:[%s299 + $0x1c] sm:$0xf]
        %v345 = vld [vmem:[%s299 + $0x20] sm:$0xf]
        %v346 = vld [vmem:[%s299 + $0x24] sm:$0xf]
        %v347 = vld [vmem:[%s299 + $0x28] sm:$0xf]
        %v348 = vld [vmem:[%s299 + $0x2c] sm:$0xf]
        %v349 = vld [vmem:[%s299 + $0x30] sm:$0xf]
        %v350 = vld [vmem:[%s299 + $0x34] sm:$0xf]
        %v351 = vld [vmem:[%s299 + $0x38] sm:$0xf]
        %v352 = vld [vmem:[%s299 + $0x3c] sm:$0xf]
        %v353 = vld [vmem:[%s299 + $0x40] sm:$0xf]
        %v354 = vld [vmem:[%s299 + $0x44] sm:$0xf]
        %v355 = vld [vmem:[%s299 + $0x48] sm:$0xf]
        %v356 = vld [vmem:[%s299 + $0x4c] sm:$0xf]
        %v357 = vld [vmem:[%s299 + $0x50] sm:$0xf]
        %v358 = vld [vmem:[%s299 + $0x54] sm:$0xf]
        %v359 = vld [vmem:[%s299 + $0x58] sm:$0xf]
        %v360 = vld [vmem:[%s299 + $0x5c] sm:$0xf]
        %v361 = vld [vmem:[%s299 + $0x60] sm:$0xf]
        %v362 = vld [vmem:[%s299 + $0x64] sm:$0xf]
        %v363 = vld [vmem:[%s299 + $0x68] sm:$0xf]
        %v364 = vld [vmem:[%s299 + $0x6c] sm:$0xf]
        %v365 = vld [vmem:[%s299 + $0x70] sm:$0xf]
        %v366 = vld [vmem:[%s299 + $0x74] sm:$0xf]
        %v367 = vld [vmem:[%s299 + $0x78] sm:$0xf]
        %v368 = vld [vmem:[%s299 + $0x7c] sm:$0xf]
        %v369 = vld [vmem:[%s3] sm:$0xff]
        %v370 = vld [vmem:[%s3 + $0x8] sm:$0xff]
        %v403 = vunpack.c.l.b16 %v337
        %v404 = vunpack.c.l.b16 %v338
        %v405 = vunpack.c.l.b16 %v339
        %v406 = vunpack.c.l.b16 %v340
        %v407 = vunpack.c.l.b16 %v341
        %v408 = vunpack.c.l.b16 %v342
        %v409 = vunpack.c.l.b16 %v343
        %v410 = vunpack.c.l.b16 %v344
        %v411 = vunpack.c.l.b16 %v345
        %v412 = vunpack.c.l.b16 %v346
        %v413 = vunpack.c.l.b16 %v347
        %v414 = vunpack.c.l.b16 %v348
        %v415 = vunpack.c.l.b16 %v349
        %v416 = vunpack.c.l.b16 %v350
        %v417 = vunpack.c.l.b16 %v351
        %v418 = vunpack.c.l.b16 %v352
        %v419 = vunpack.c.l.b16 %v353
        %v420 = vunpack.c.l.b16 %v354
        %v421 = vunpack.c.l.b16 %v355
        %v422 = vunpack.c.l.b16 %v356
        %v423 = vunpack.c.l.b16 %v357
        %v424 = vunpack.c.l.b16 %v358
        %v425 = vunpack.c.l.b16 %v359
        %v426 = vunpack.c.l.b16 %v360
        %v427 = vunpack.c.l.b16 %v361
        %v428 = vunpack.c.l.b16 %v362
        %v429 = vunpack.c.l.b16 %v363
        %v430 = vunpack.c.l.b16 %v364
        %v431 = vunpack.c.l.b16 %v365
        %v432 = vunpack.c.l.b16 %v366
        %v433 = vunpack.c.l.b16 %v367
        %v434 = vunpack.c.l.b16 %v368
        %v435 = vpack.c.b16 %v404, %v403
        %v436 = vpack.c.b16 %v406, %v405
        %v437 = vpack.c.b16 %v408, %v407
        %v438 = vpack.c.b16 %v410, %v409
        %v439 = vpack.c.b16 %v412, %v411
        %v440 = vpack.c.b16 %v414, %v413
        %v441 = vpack.c.b16 %v416, %v415
        %v442 = vpack.c.b16 %v418, %v417
        %v443 = vpack.c.b16 %v420, %v419
        %v444 = vpack.c.b16 %v422, %v421
        %v445 = vpack.c.b16 %v424, %v423
        %v446 = vpack.c.b16 %v426, %v425
        %v447 = vpack.c.b16 %v428, %v427
        %v448 = vpack.c.b16 %v430, %v429
        %v449 = vpack.c.b16 %v432, %v431
        %v450 = vpack.c.b16 %v434, %v433
        %v453 = vunpack.c.l.b16 %v369
        %v454 = vunpack.c.h.b16 %v369
        %v455 = vunpack.c.l.b16 %v370
        %v456 = vunpack.c.h.b16 %v370
        %v457 = vpack.c.b16 %v455, %v453
        %v458 = vpack.c.b16 %v456, %v454
        %vm461 = vcmask 130048
        %v463 = vsel %vm461, %v435, 0
        %v466 = vsel %vm461, %v436, 0
        %v469 = vsel %vm461, %v437, 0
        %v472 = vsel %vm461, %v438, 0
        %v475 = vsel %vm461, %v439, 0
        %v478 = vsel %vm461, %v440, 0
        %v481 = vsel %vm461, %v441, 0
        %v484 = vsel %vm461, %v442, 0
        %v487 = vsel %vm461, %v443, 0
        %v490 = vsel %vm461, %v444, 0
        %v493 = vsel %vm461, %v445, 0
        %v496 = vsel %vm461, %v446, 0
        %v499 = vsel %vm461, %v447, 0
        %v502 = vsel %vm461, %v448, 0
        %v505 = vsel %vm461, %v449, 0
        %v508 = vsel %vm461, %v450, 0
        %510 = vmatprep.subr.bf16.mxu0 0
        %511 = vmatpush1.bf16.msra.mxu0 0
        %512 = vmatprep.subr.bf16.mxu0 0
        %513 = vmatpush1.bf16.msra.mxu0 0
        %514 = vmatprep.subr.bf16.mxu0 0
        %515 = vmatpush1.bf16.msra.mxu0 0
        %516 = vmatprep.subr.bf16.mxu0 0
        %517 = vmatpush1.bf16.msra.mxu0 0
        %518 = vmatprep.subr.bf16.mxu0 0
        %519 = vmatpush1.bf16.msra.mxu0 0
        %520 = vmatprep.subr.bf16.mxu0 0
        %521 = vmatpush1.bf16.msra.mxu0 0
        %522 = vmatprep.subr.bf16.mxu0 0
        %523 = vmatpush1.bf16.msra.mxu0 0
        %524 = vmatprep.subr.bf16.mxu0 %v458
        %525 = vmatpush1.bf16.msra.mxu0 %v457
        %526 = vmatprep.subr.bf16.mxu0 0
        %527 = vmatpush2.bf16.msra.mxu0 0
        %528 = vmatprep.subr.bf16.mxu0 0
        %529 = vmatpush2.bf16.msra.mxu0 0
        %530 = vmatprep.subr.bf16.mxu0 0
        %531 = vmatpush2.bf16.msra.mxu0 0
        %532 = vmatprep.subr.bf16.mxu0 0
        %533 = vmatpush2.bf16.msra.mxu0 0
        %534 = vmatprep.subr.bf16.mxu0 0
        %535 = vmatpush2.bf16.msra.mxu0 0
        %536 = vmatprep.subr.bf16.mxu0 0
        %537 = vmatpush2.bf16.msra.mxu0 0
        %538 = vmatprep.subr.bf16.mxu0 0
        %539 = vmatpush2.bf16.msra.mxu0 0
        %540 = vmatprep.subr.bf16.mxu0 0
        %541 = vmatpush2.bf16.msra.mxu0 0
        %542 = vmatprep.mubr.bf16.mxu0 0
        %543 = vmatmul.mubr.bf16.gmra.mxu0 %v463
        %v544 = vpop.f32.mrf.mxu0
        %v545 = vadd.f32 0.0, %v544
        %v546 = vpop.f32.mrf.mxu0
        %v547 = vadd.f32 0.0, %v546
        %v548 = vpop.f32.mrf.mxu0
        %v549 = vadd.f32 0.0, %v548
        %v550 = vpop.f32.mrf.mxu0
        %v551 = vadd.f32 0.0, %v550
        %552 = vmatprep.mubr.bf16.mxu0 0
        %553 = vmatmul.mubr.bf16.gmra.mxu0 %v466
        %v554 = vpop.f32.mrf.mxu0
        %v555 = vadd.f32 0.0, %v554
        %v556 = vpop.f32.mrf.mxu0
        %v557 = vadd.f32 0.0, %v556
        %v558 = vpop.f32.mrf.mxu0
        %v559 = vadd.f32 0.0, %v558
        %v560 = vpop.f32.mrf.mxu0
        %v561 = vadd.f32 0.0, %v560
        %562 = vmatprep.mubr.bf16.mxu0 0
        %563 = vmatmul.mubr.bf16.gmra.mxu0 %v469
        %v564 = vpop.f32.mrf.mxu0
        %v565 = vadd.f32 0.0, %v564
        %v566 = vpop.f32.mrf.mxu0
        %v567 = vadd.f32 0.0, %v566
        %v568 = vpop.f32.mrf.mxu0
        %v569 = vadd.f32 0.0, %v568
        %v570 = vpop.f32.mrf.mxu0
        %v571 = vadd.f32 0.0, %v570
        %572 = vmatprep.mubr.bf16.mxu0 0
        %573 = vmatmul.mubr.bf16.gmra.mxu0 %v472
        %v574 = vpop.f32.mrf.mxu0
        %v575 = vadd.f32 0.0, %v574
        %v576 = vpop.f32.mrf.mxu0
        %v577 = vadd.f32 0.0, %v576
        %v578 = vpop.f32.mrf.mxu0
        %v579 = vadd.f32 0.0, %v578
        %v580 = vpop.f32.mrf.mxu0
        %v581 = vadd.f32 0.0, %v580
        %582 = vmatprep.mubr.bf16.mxu0 0
        %583 = vmatmul.mubr.bf16.gmra.mxu0 %v475
        %v584 = vpop.f32.mrf.mxu0
        %v585 = vadd.f32 0.0, %v584
        %v586 = vpop.f32.mrf.mxu0
        %v587 = vadd.f32 0.0, %v586
        %v588 = vpop.f32.mrf.mxu0
        %v589 = vadd.f32 0.0, %v588
        %v590 = vpop.f32.mrf.mxu0
        %v591 = vadd.f32 0.0, %v590
        %592 = vmatprep.mubr.bf16.mxu0 0
        %593 = vmatmul.mubr.bf16.gmra.mxu0 %v478
        %v594 = vpop.f32.mrf.mxu0
        %v595 = vadd.f32 0.0, %v594
        %v596 = vpop.f32.mrf.mxu0
        %v597 = vadd.f32 0.0, %v596
        %v598 = vpop.f32.mrf.mxu0
        %v599 = vadd.f32 0.0, %v598
        %v600 = vpop.f32.mrf.mxu0
        %v601 = vadd.f32 0.0, %v600
        %602 = vmatprep.mubr.bf16.mxu0 0
        %603 = vmatmul.mubr.bf16.gmra.mxu0 %v481
        %v604 = vpop.f32.mrf.mxu0
        %v605 = vadd.f32 0.0, %v604
        %v606 = vpop.f32.mrf.mxu0
        %v607 = vadd.f32 0.0, %v606
        %v608 = vpop.f32.mrf.mxu0
        %v609 = vadd.f32 0.0, %v608
        %v610 = vpop.f32.mrf.mxu0
        %v611 = vadd.f32 0.0, %v610
        %612 = vmatprep.mubr.bf16.mxu0 0
        %613 = vmatmul.mubr.bf16.gmra.mxu0 %v484
        %v614 = vpop.f32.mrf.mxu0
        %v615 = vadd.f32 0.0, %v614
        %v616 = vpop.f32.mrf.mxu0
        %v617 = vadd.f32 0.0, %v616
        %v618 = vpop.f32.mrf.mxu0
        %v619 = vadd.f32 0.0, %v618
        %v620 = vpop.f32.mrf.mxu0
        %v621 = vadd.f32 0.0, %v620
        %622 = vmatprep.mubr.bf16.mxu0 0
        %623 = vmatmul.mubr.bf16.gmra.mxu0 %v487
        %v624 = vpop.f32.mrf.mxu0
        %v625 = vadd.f32 0.0, %v624
        %v626 = vpop.f32.mrf.mxu0
        %v627 = vadd.f32 0.0, %v626
        %v628 = vpop.f32.mrf.mxu0
        %v629 = vadd.f32 0.0, %v628
        %v630 = vpop.f32.mrf.mxu0
        %v631 = vadd.f32 0.0, %v630
        %632 = vmatprep.mubr.bf16.mxu0 0
        %633 = vmatmul.mubr.bf16.gmra.mxu0 %v490
        %v634 = vpop.f32.mrf.mxu0
        %v635 = vadd.f32 0.0, %v634
        %v636 = vpop.f32.mrf.mxu0
        %v637 = vadd.f32 0.0, %v636
        %v638 = vpop.f32.mrf.mxu0
        %v639 = vadd.f32 0.0, %v638
        %v640 = vpop.f32.mrf.mxu0
        %v641 = vadd.f32 0.0, %v640
        %642 = vmatprep.mubr.bf16.mxu0 0
        %643 = vmatmul.mubr.bf16.gmra.mxu0 %v493
        %v644 = vpop.f32.mrf.mxu0
        %v645 = vadd.f32 0.0, %v644
        %v646 = vpop.f32.mrf.mxu0
        %v647 = vadd.f32 0.0, %v646
        %v648 = vpop.f32.mrf.mxu0
        %v649 = vadd.f32 0.0, %v648
        %v650 = vpop.f32.mrf.mxu0
        %v651 = vadd.f32 0.0, %v650
        %652 = vmatprep.mubr.bf16.mxu0 0
        %653 = vmatmul.mubr.bf16.gmra.mxu0 %v496
        %v654 = vpop.f32.mrf.mxu0
        %v655 = vadd.f32 0.0, %v654
        %v656 = vpop.f32.mrf.mxu0
        %v657 = vadd.f32 0.0, %v656
        %v658 = vpop.f32.mrf.mxu0
        %v659 = vadd.f32 0.0, %v658
        %v660 = vpop.f32.mrf.mxu0
        %v661 = vadd.f32 0.0, %v660
        %662 = vmatprep.mubr.bf16.mxu0 0
        %663 = vmatmul.mubr.bf16.gmra.mxu0 %v499
        %v664 = vpop.f32.mrf.mxu0
        %v665 = vadd.f32 0.0, %v664
        %v666 = vpop.f32.mrf.mxu0
        %v667 = vadd.f32 0.0, %v666
        %v668 = vpop.f32.mrf.mxu0
        %v669 = vadd.f32 0.0, %v668
        %v670 = vpop.f32.mrf.mxu0
        %v671 = vadd.f32 0.0, %v670
        %672 = vmatprep.mubr.bf16.mxu0 0
        %673 = vmatmul.mubr.bf16.gmra.mxu0 %v502
        %v674 = vpop.f32.mrf.mxu0
        %v675 = vadd.f32 0.0, %v674
        %v676 = vpop.f32.mrf.mxu0
        %v677 = vadd.f32 0.0, %v676
        %v678 = vpop.f32.mrf.mxu0
        %v679 = vadd.f32 0.0, %v678
        %v680 = vpop.f32.mrf.mxu0
        %v681 = vadd.f32 0.0, %v680
        %682 = vmatprep.mubr.bf16.mxu0 0
        %683 = vmatmul.mubr.bf16.gmra.mxu0 %v505
        %v684 = vpop.f32.mrf.mxu0
        %v685 = vadd.f32 0.0, %v684
        %v686 = vpop.f32.mrf.mxu0
        %v687 = vadd.f32 0.0, %v686
        %v688 = vpop.f32.mrf.mxu0
        %v689 = vadd.f32 0.0, %v688
        %v690 = vpop.f32.mrf.mxu0
        %v691 = vadd.f32 0.0, %v690
        %692 = vmatprep.mubr.bf16.mxu0 0
        %693 = vmatmul.mubr.bf16.gmra.mxu0 %v508
        %v694 = vpop.f32.mrf.mxu0
        %v695 = vadd.f32 0.0, %v694
        %v696 = vpop.f32.mrf.mxu0
        %v697 = vadd.f32 0.0, %v696
        %v698 = vpop.f32.mrf.mxu0
        %v699 = vadd.f32 0.0, %v698
        %v700 = vpop.f32.mrf.mxu0
        %v701 = vadd.f32 0.0, %v700
        %702 = vdwg.mxu0
        %v735 = vunpack.c.l.b16 %v303
        %v736 = vunpack.c.l.b16 %v304
        %v737 = vunpack.c.l.b16 %v305
        %v738 = vunpack.c.l.b16 %v306
        %v739 = vunpack.c.l.b16 %v307
        %v740 = vunpack.c.l.b16 %v308
        %v741 = vunpack.c.l.b16 %v309
        %v742 = vunpack.c.l.b16 %v310
        %v743 = vunpack.c.l.b16 %v311
        %v744 = vunpack.c.l.b16 %v312
        %v745 = vunpack.c.l.b16 %v313
        %v746 = vunpack.c.l.b16 %v314
        %v747 = vunpack.c.l.b16 %v315
        %v748 = vunpack.c.l.b16 %v316
        %v749 = vunpack.c.l.b16 %v317
        %v750 = vunpack.c.l.b16 %v318
        %v751 = vunpack.c.l.b16 %v319
        %v752 = vunpack.c.l.b16 %v320
        %v753 = vunpack.c.l.b16 %v321
        %v754 = vunpack.c.l.b16 %v322
        %v755 = vunpack.c.l.b16 %v323
        %v756 = vunpack.c.l.b16 %v324
        %v757 = vunpack.c.l.b16 %v325
        %v758 = vunpack.c.l.b16 %v326
        %v759 = vunpack.c.l.b16 %v327
        %v760 = vunpack.c.l.b16 %v328
        %v761 = vunpack.c.l.b16 %v329
        %v762 = vunpack.c.l.b16 %v330
        %v763 = vunpack.c.l.b16 %v331
        %v764 = vunpack.c.l.b16 %v332
        %v765 = vunpack.c.l.b16 %v333
        %v766 = vunpack.c.l.b16 %v334
        %v767 = vpack.c.b16 %v736, %v735
        %v768 = vpack.c.b16 %v738, %v737
        %v769 = vpack.c.b16 %v740, %v739
        %v770 = vpack.c.b16 %v742, %v741
        %v771 = vpack.c.b16 %v744, %v743
        %v772 = vpack.c.b16 %v746, %v745
        %v773 = vpack.c.b16 %v748, %v747
        %v774 = vpack.c.b16 %v750, %v749
        %v775 = vpack.c.b16 %v752, %v751
        %v776 = vpack.c.b16 %v754, %v753
        %v777 = vpack.c.b16 %v756, %v755
        %v778 = vpack.c.b16 %v758, %v757
        %v779 = vpack.c.b16 %v760, %v759
        %v780 = vpack.c.b16 %v762, %v761
        %v781 = vpack.c.b16 %v764, %v763
        %v782 = vpack.c.b16 %v766, %v765
        %v785 = vunpack.c.l.b16 %v335
        %v786 = vunpack.c.h.b16 %v335
        %v787 = vunpack.c.l.b16 %v336
        %v788 = vunpack.c.h.b16 %v336
        %v789 = vpack.c.b16 %v787, %v785
        %v790 = vpack.c.b16 %v788, %v786
        %v794 = vsel %vm461, %v767, 0
        %v797 = vsel %vm461, %v768, 0
        %v800 = vsel %vm461, %v769, 0
        %v803 = vsel %vm461, %v770, 0
        %v806 = vsel %vm461, %v771, 0
        %v809 = vsel %vm461, %v772, 0
        %v812 = vsel %vm461, %v773, 0
        %v815 = vsel %vm461, %v774, 0
        %v818 = vsel %vm461, %v775, 0
        %v821 = vsel %vm461, %v776, 0
        %v824 = vsel %vm461, %v777, 0
        %v827 = vsel %vm461, %v778, 0
        %v830 = vsel %vm461, %v779, 0
        %v833 = vsel %vm461, %v780, 0
        %v836 = vsel %vm461, %v781, 0
        %v839 = vsel %vm461, %v782, 0
        %841 = vmatprep.subr.bf16.mxu0 0
        %842 = vmatpush1.bf16.msra.mxu0 0
        %843 = vmatprep.subr.bf16.mxu0 0
        %844 = vmatpush1.bf16.msra.mxu0 0
        %845 = vmatprep.subr.bf16.mxu0 0
        %846 = vmatpush1.bf16.msra.mxu0 0
        %847 = vmatprep.subr.bf16.mxu0 0
        %848 = vmatpush1.bf16.msra.mxu0 0
        %849 = vmatprep.subr.bf16.mxu0 0
        %850 = vmatpush1.bf16.msra.mxu0 0
        %851 = vmatprep.subr.bf16.mxu0 0
        %852 = vmatpush1.bf16.msra.mxu0 0
        %853 = vmatprep.subr.bf16.mxu0 0
        %854 = vmatpush1.bf16.msra.mxu0 0
        %855 = vmatprep.subr.bf16.mxu0 %v790
        %856 = vmatpush1.bf16.msra.mxu0 %v789
        %857 = vmatprep.subr.bf16.mxu0 0
        %858 = vmatpush2.bf16.msra.mxu0 0
        %859 = vmatprep.subr.bf16.mxu0 0
        %860 = vmatpush2.bf16.msra.mxu0 0
        %861 = vmatprep.subr.bf16.mxu0 0
        %862 = vmatpush2.bf16.msra.mxu0 0
        %863 = vmatprep.subr.bf16.mxu0 0
        %864 = vmatpush2.bf16.msra.mxu0 0
        %865 = vmatprep.subr.bf16.mxu0 0
        %866 = vmatpush2.bf16.msra.mxu0 0
        %867 = vmatprep.subr.bf16.mxu0 0
        %868 = vmatpush2.bf16.msra.mxu0 0
        %869 = vmatprep.subr.bf16.mxu0 0
        %870 = vmatpush2.bf16.msra.mxu0 0
        %871 = vmatprep.subr.bf16.mxu0 0
        %872 = vmatpush2.bf16.msra.mxu0 0
        %873 = vmatprep.mubr.bf16.mxu0 0
        %874 = vmatmul.mubr.bf16.gmra.mxu0 %v794
        %v875 = vpop.f32.mrf.mxu0
        %v876 = vadd.f32 %v545, %v875
        %v877 = vpop.f32.mrf.mxu0
        %v878 = vadd.f32 %v547, %v877
        %v879 = vpop.f32.mrf.mxu0
        %v880 = vadd.f32 %v549, %v879
        %v881 = vpop.f32.mrf.mxu0
        %v882 = vadd.f32 %v551, %v881
        %883 = vmatprep.mubr.bf16.mxu0 0
        %884 = vmatmul.mubr.bf16.gmra.mxu0 %v797
        %v885 = vpop.f32.mrf.mxu0
        %v886 = vadd.f32 %v555, %v885
        %v887 = vpop.f32.mrf.mxu0
        %v888 = vadd.f32 %v557, %v887
        %v889 = vpop.f32.mrf.mxu0
        %v890 = vadd.f32 %v559, %v889
        %v891 = vpop.f32.mrf.mxu0
        %v892 = vadd.f32 %v561, %v891
        %893 = vmatprep.mubr.bf16.mxu0 0
        %894 = vmatmul.mubr.bf16.gmra.mxu0 %v800
        %v895 = vpop.f32.mrf.mxu0
        %v896 = vadd.f32 %v565, %v895
        %v897 = vpop.f32.mrf.mxu0
        %v898 = vadd.f32 %v567, %v897
        %v899 = vpop.f32.mrf.mxu0
        %v900 = vadd.f32 %v569, %v899
        %v901 = vpop.f32.mrf.mxu0
        %v902 = vadd.f32 %v571, %v901
        %903 = vmatprep.mubr.bf16.mxu0 0
        %904 = vmatmul.mubr.bf16.gmra.mxu0 %v803
        %v905 = vpop.f32.mrf.mxu0
        %v906 = vadd.f32 %v575, %v905
        %v907 = vpop.f32.mrf.mxu0
        %v908 = vadd.f32 %v577, %v907
        %v909 = vpop.f32.mrf.mxu0
        %v910 = vadd.f32 %v579, %v909
        %v911 = vpop.f32.mrf.mxu0
        %v912 = vadd.f32 %v581, %v911
        %913 = vmatprep.mubr.bf16.mxu0 0
        %914 = vmatmul.mubr.bf16.gmra.mxu0 %v806
        %v915 = vpop.f32.mrf.mxu0
        %v916 = vadd.f32 %v585, %v915
        %v917 = vpop.f32.mrf.mxu0
        %v918 = vadd.f32 %v587, %v917
        %v919 = vpop.f32.mrf.mxu0
        %v920 = vadd.f32 %v589, %v919
        %v921 = vpop.f32.mrf.mxu0
        %v922 = vadd.f32 %v591, %v921
        %923 = vmatprep.mubr.bf16.mxu0 0
        %924 = vmatmul.mubr.bf16.gmra.mxu0 %v809
        %v925 = vpop.f32.mrf.mxu0
        %v926 = vadd.f32 %v595, %v925
        %v927 = vpop.f32.mrf.mxu0
        %v928 = vadd.f32 %v597, %v927
        %v929 = vpop.f32.mrf.mxu0
        %v930 = vadd.f32 %v599, %v929
        %v931 = vpop.f32.mrf.mxu0
        %v932 = vadd.f32 %v601, %v931
        %933 = vmatprep.mubr.bf16.mxu0 0
        %934 = vmatmul.mubr.bf16.gmra.mxu0 %v812
        %v935 = vpop.f32.mrf.mxu0
        %v936 = vadd.f32 %v605, %v935
        %v937 = vpop.f32.mrf.mxu0
        %v938 = vadd.f32 %v607, %v937
        %v939 = vpop.f32.mrf.mxu0
        %v940 = vadd.f32 %v609, %v939
        %v941 = vpop.f32.mrf.mxu0
        %v942 = vadd.f32 %v611, %v941
        %943 = vmatprep.mubr.bf16.mxu0 0
        %944 = vmatmul.mubr.bf16.gmra.mxu0 %v815
        %v945 = vpop.f32.mrf.mxu0
        %v946 = vadd.f32 %v615, %v945
        %v947 = vpop.f32.mrf.mxu0
        %v948 = vadd.f32 %v617, %v947
        %v949 = vpop.f32.mrf.mxu0
        %v950 = vadd.f32 %v619, %v949
        %v951 = vpop.f32.mrf.mxu0
        %v952 = vadd.f32 %v621, %v951
        %953 = vmatprep.mubr.bf16.mxu0 0
        %954 = vmatmul.mubr.bf16.gmra.mxu0 %v818
        %v955 = vpop.f32.mrf.mxu0
        %v956 = vadd.f32 %v625, %v955
        %v957 = vpop.f32.mrf.mxu0
        %v958 = vadd.f32 %v627, %v957
        %v959 = vpop.f32.mrf.mxu0
        %v960 = vadd.f32 %v629, %v959
        %v961 = vpop.f32.mrf.mxu0
        %v962 = vadd.f32 %v631, %v961
        %963 = vmatprep.mubr.bf16.mxu0 0
        %964 = vmatmul.mubr.bf16.gmra.mxu0 %v821
        %v965 = vpop.f32.mrf.mxu0
        %v966 = vadd.f32 %v635, %v965
        %v967 = vpop.f32.mrf.mxu0
        %v968 = vadd.f32 %v637, %v967
        %v969 = vpop.f32.mrf.mxu0
        %v970 = vadd.f32 %v639, %v969
        %v971 = vpop.f32.mrf.mxu0
        %v972 = vadd.f32 %v641, %v971
        %973 = vmatprep.mubr.bf16.mxu0 0
        %974 = vmatmul.mubr.bf16.gmra.mxu0 %v824
        %v975 = vpop.f32.mrf.mxu0
        %v976 = vadd.f32 %v645, %v975
        %v977 = vpop.f32.mrf.mxu0
        %v978 = vadd.f32 %v647, %v977
        %v979 = vpop.f32.mrf.mxu0
        %v980 = vadd.f32 %v649, %v979
        %v981 = vpop.f32.mrf.mxu0
        %v982 = vadd.f32 %v651, %v981
        %983 = vmatprep.mubr.bf16.mxu0 0
        %984 = vmatmul.mubr.bf16.gmra.mxu0 %v827
        %v985 = vpop.f32.mrf.mxu0
        %v986 = vadd.f32 %v655, %v985
        %v987 = vpop.f32.mrf.mxu0
        %v988 = vadd.f32 %v657, %v987
        %v989 = vpop.f32.mrf.mxu0
        %v990 = vadd.f32 %v659, %v989
        %v991 = vpop.f32.mrf.mxu0
        %v992 = vadd.f32 %v661, %v991
        %993 = vmatprep.mubr.bf16.mxu0 0
        %994 = vmatmul.mubr.bf16.gmra.mxu0 %v830
        %v995 = vpop.f32.mrf.mxu0
        %v996 = vadd.f32 %v665, %v995
        %v997 = vpop.f32.mrf.mxu0
        %v998 = vadd.f32 %v667, %v997
        %v999 = vpop.f32.mrf.mxu0
        %v1000 = vadd.f32 %v669, %v999
        %v1001 = vpop.f32.mrf.mxu0
        %v1002 = vadd.f32 %v671, %v1001
        %1003 = vmatprep.mubr.bf16.mxu0 0
        %1004 = vmatmul.mubr.bf16.gmra.mxu0 %v833
        %v1005 = vpop.f32.mrf.mxu0
        %v1006 = vadd.f32 %v675, %v1005
        %v1007 = vpop.f32.mrf.mxu0
        %v1008 = vadd.f32 %v677, %v1007
        %v1009 = vpop.f32.mrf.mxu0
        %v1010 = vadd.f32 %v679, %v1009
        %v1011 = vpop.f32.mrf.mxu0
        %v1012 = vadd.f32 %v681, %v1011
        %1013 = vmatprep.mubr.bf16.mxu0 0
        %1014 = vmatmul.mubr.bf16.gmra.mxu0 %v836
        %v1015 = vpop.f32.mrf.mxu0
        %v1016 = vadd.f32 %v685, %v1015
        %v1017 = vpop.f32.mrf.mxu0
        %v1018 = vadd.f32 %v687, %v1017
        %v1019 = vpop.f32.mrf.mxu0
        %v1020 = vadd.f32 %v689, %v1019
        %v1021 = vpop.f32.mrf.mxu0
        %v1022 = vadd.f32 %v691, %v1021
        %1023 = vmatprep.mubr.bf16.mxu0 0
        %1024 = vmatmul.mubr.bf16.gmra.mxu0 %v839
        %v1025 = vpop.f32.mrf.mxu0
        %v1026 = vadd.f32 %v695, %v1025
        %v1027 = vpop.f32.mrf.mxu0
        %v1028 = vadd.f32 %v697, %v1027
        %v1029 = vpop.f32.mrf.mxu0
        %v1030 = vadd.f32 %v699, %v1029
        %v1031 = vpop.f32.mrf.mxu0
        %v1032 = vadd.f32 %v701, %v1031
        %1033 = vdwg.mxu0
        %v1034 = vld [vmem:[%s4] sm:$0x3]
        %v1036 = vlaneseq
        %v1037 = vshrl.u32 %v1036, 7
        %v1038 = vsub.s32 0, %v1037
        %v1039 = vrot.slane %v1034, %v1038
        %v1040 = vlaneseq
        %v1041 = vshrl.u32 %v1040, 7
        %v1042 = vsub.s32 1, %v1041
        %v1043 = vrot.slane %v1034, %v1042
        %v1046 = vadd.f32 %v876, %v1039
        %v1047 = vadd.f32 %v878, %v1043
        %v1048 = vadd.f32 %v880, %v1039
        %v1049 = vadd.f32 %v882, %v1043
        %v1050 = vadd.f32 %v886, %v1039
        %v1051 = vadd.f32 %v888, %v1043
        %v1052 = vadd.f32 %v890, %v1039
        %v1053 = vadd.f32 %v892, %v1043
        %v1054 = vadd.f32 %v896, %v1039
        %v1055 = vadd.f32 %v898, %v1043
        %v1056 = vadd.f32 %v900, %v1039
        %v1057 = vadd.f32 %v902, %v1043
        %v1058 = vadd.f32 %v906, %v1039
        %v1059 = vadd.f32 %v908, %v1043
        %v1060 = vadd.f32 %v910, %v1039
        %v1061 = vadd.f32 %v912, %v1043
        %v1062 = vadd.f32 %v916, %v1039
        %v1063 = vadd.f32 %v918, %v1043
        %v1064 = vadd.f32 %v920, %v1039
        %v1065 = vadd.f32 %v922, %v1043
        %v1066 = vadd.f32 %v926, %v1039
        %v1067 = vadd.f32 %v928, %v1043
        %v1068 = vadd.f32 %v930, %v1039
        %v1069 = vadd.f32 %v932, %v1043
        %v1070 = vadd.f32 %v936, %v1039
        %v1071 = vadd.f32 %v938, %v1043
        %v1072 = vadd.f32 %v940, %v1039
        %v1073 = vadd.f32 %v942, %v1043
        %v1074 = vadd.f32 %v946, %v1039
        %v1075 = vadd.f32 %v948, %v1043
        %v1076 = vadd.f32 %v950, %v1039
        %v1077 = vadd.f32 %v952, %v1043
        %v1078 = vadd.f32 %v956, %v1039
        %v1079 = vadd.f32 %v958, %v1043
        %v1080 = vadd.f32 %v960, %v1039
        %v1081 = vadd.f32 %v962, %v1043
        %v1082 = vadd.f32 %v966, %v1039
        %v1083 = vadd.f32 %v968, %v1043
        %v1084 = vadd.f32 %v970, %v1039
        %v1085 = vadd.f32 %v972, %v1043
        %v1086 = vadd.f32 %v976, %v1039
        %v1087 = vadd.f32 %v978, %v1043
        %v1088 = vadd.f32 %v980, %v1039
        %v1089 = vadd.f32 %v982, %v1043
        %v1090 = vadd.f32 %v986, %v1039
        %v1091 = vadd.f32 %v988, %v1043
        %v1092 = vadd.f32 %v990, %v1039
        %v1093 = vadd.f32 %v992, %v1043
        %v1094 = vadd.f32 %v996, %v1039
        %v1095 = vadd.f32 %v998, %v1043
        %v1096 = vadd.f32 %v1000, %v1039
        %v1097 = vadd.f32 %v1002, %v1043
        %v1098 = vadd.f32 %v1006, %v1039
        %v1099 = vadd.f32 %v1008, %v1043
        %v1100 = vadd.f32 %v1010, %v1039
        %v1101 = vadd.f32 %v1012, %v1043
        %v1102 = vadd.f32 %v1016, %v1039
        %v1103 = vadd.f32 %v1018, %v1043
        %v1104 = vadd.f32 %v1020, %v1039
        %v1105 = vadd.f32 %v1022, %v1043
        %v1106 = vadd.f32 %v1026, %v1039
        %v1107 = vadd.f32 %v1028, %v1043
        %v1108 = vadd.f32 %v1030, %v1039
        %v1109 = vadd.f32 %v1032, %v1043
        %vm1110 = vcmp.gt.f32.partialorder %v1046, 0.0
        %vm1111 = vcmp.gt.f32.partialorder %v1047, 0.0
        %vm1112 = vcmp.gt.f32.partialorder %v1048, 0.0
        %vm1113 = vcmp.gt.f32.partialorder %v1049, 0.0
        %vm1114 = vcmp.gt.f32.partialorder %v1050, 0.0
        %vm1115 = vcmp.gt.f32.partialorder %v1051, 0.0
        %vm1116 = vcmp.gt.f32.partialorder %v1052, 0.0
        %vm1117 = vcmp.gt.f32.partialorder %v1053, 0.0
        %vm1118 = vcmp.gt.f32.partialorder %v1054, 0.0
        %vm1119 = vcmp.gt.f32.partialorder %v1055, 0.0
        %vm1120 = vcmp.gt.f32.partialorder %v1056, 0.0
        %vm1121 = vcmp.gt.f32.partialorder %v1057, 0.0
        %vm1122 = vcmp.gt.f32.partialorder %v1058, 0.0
        %vm1123 = vcmp.gt.f32.partialorder %v1059, 0.0
        %vm1124 = vcmp.gt.f32.partialorder %v1060, 0.0
        %vm1125 = vcmp.gt.f32.partialorder %v1061, 0.0
        %vm1126 = vcmp.gt.f32.partialorder %v1062, 0.0
        %vm1127 = vcmp.gt.f32.partialorder %v1063, 0.0
        %vm1128 = vcmp.gt.f32.partialorder %v1064, 0.0
        %vm1129 = vcmp.gt.f32.partialorder %v1065, 0.0
        %vm1130 = vcmp.gt.f32.partialorder %v1066, 0.0
        %vm1131 = vcmp.gt.f32.partialorder %v1067, 0.0
        %vm1132 = vcmp.gt.f32.partialorder %v1068, 0.0
        %vm1133 = vcmp.gt.f32.partialorder %v1069, 0.0
        %vm1134 = vcmp.gt.f32.partialorder %v1070, 0.0
        %vm1135 = vcmp.gt.f32.partialorder %v1071, 0.0
        %vm1136 = vcmp.gt.f32.partialorder %v1072, 0.0
        %vm1137 = vcmp.gt.f32.partialorder %v1073, 0.0
        %vm1138 = vcmp.gt.f32.partialorder %v1074, 0.0
        %vm1139 = vcmp.gt.f32.partialorder %v1075, 0.0
        %vm1140 = vcmp.gt.f32.partialorder %v1076, 0.0
        %vm1141 = vcmp.gt.f32.partialorder %v1077, 0.0
        %vm1142 = vcmp.gt.f32.partialorder %v1078, 0.0
        %vm1143 = vcmp.gt.f32.partialorder %v1079, 0.0
        %vm1144 = vcmp.gt.f32.partialorder %v1080, 0.0
        %vm1145 = vcmp.gt.f32.partialorder %v1081, 0.0
        %vm1146 = vcmp.gt.f32.partialorder %v1082, 0.0
        %vm1147 = vcmp.gt.f32.partialorder %v1083, 0.0
        %vm1148 = vcmp.gt.f32.partialorder %v1084, 0.0
        %vm1149 = vcmp.gt.f32.partialorder %v1085, 0.0
        %vm1150 = vcmp.gt.f32.partialorder %v1086, 0.0
        %vm1151 = vcmp.gt.f32.partialorder %v1087, 0.0
        %vm1152 = vcmp.gt.f32.partialorder %v1088, 0.0
        %vm1153 = vcmp.gt.f32.partialorder %v1089, 0.0
        %vm1154 = vcmp.gt.f32.partialorder %v1090, 0.0
        %vm1155 = vcmp.gt.f32.partialorder %v1091, 0.0
        %vm1156 = vcmp.gt.f32.partialorder %v1092, 0.0
        %vm1157 = vcmp.gt.f32.partialorder %v1093, 0.0
        %vm1158 = vcmp.gt.f32.partialorder %v1094, 0.0
        %vm1159 = vcmp.gt.f32.partialorder %v1095, 0.0
        %vm1160 = vcmp.gt.f32.partialorder %v1096, 0.0
        %vm1161 = vcmp.gt.f32.partialorder %v1097, 0.0
        %vm1162 = vcmp.gt.f32.partialorder %v1098, 0.0
        %vm1163 = vcmp.gt.f32.partialorder %v1099, 0.0
        %vm1164 = vcmp.gt.f32.partialorder %v1100, 0.0
        %vm1165 = vcmp.gt.f32.partialorder %v1101, 0.0
        %vm1166 = vcmp.gt.f32.partialorder %v1102, 0.0
        %vm1167 = vcmp.gt.f32.partialorder %v1103, 0.0
        %vm1168 = vcmp.gt.f32.partialorder %v1104, 0.0
        %vm1169 = vcmp.gt.f32.partialorder %v1105, 0.0
        %vm1170 = vcmp.gt.f32.partialorder %v1106, 0.0
        %vm1171 = vcmp.gt.f32.partialorder %v1107, 0.0
        %vm1172 = vcmp.gt.f32.partialorder %v1108, 0.0
        %vm1173 = vcmp.gt.f32.partialorder %v1109, 0.0
        %v1174 = vmul.f32 %v1046, 0.01
        %v1175 = vmul.f32 %v1047, 0.01
        %v1176 = vmul.f32 %v1048, 0.01
        %v1177 = vmul.f32 %v1049, 0.01
        %v1178 = vmul.f32 %v1050, 0.01
        %v1179 = vmul.f32 %v1051, 0.01
        %v1180 = vmul.f32 %v1052, 0.01
        %v1181 = vmul.f32 %v1053, 0.01
        %v1182 = vmul.f32 %v1054, 0.01
        %v1183 = vmul.f32 %v1055, 0.01
        %v1184 = vmul.f32 %v1056, 0.01
        %v1185 = vmul.f32 %v1057, 0.01
        %v1186 = vmul.f32 %v1058, 0.01
        %v1187 = vmul.f32 %v1059, 0.01
        %v1188 = vmul.f32 %v1060, 0.01
        %v1189 = vmul.f32 %v1061, 0.01
        %v1190 = vmul.f32 %v1062, 0.01
        %v1191 = vmul.f32 %v1063, 0.01
        %v1192 = vmul.f32 %v1064, 0.01
        %v1193 = vmul.f32 %v1065, 0.01
        %v1194 = vmul.f32 %v1066, 0.01
        %v1195 = vmul.f32 %v1067, 0.01
        %v1196 = vmul.f32 %v1068, 0.01
        %v1197 = vmul.f32 %v1069, 0.01
        %v1198 = vmul.f32 %v1070, 0.01
        %v1199 = vmul.f32 %v1071, 0.01
        %v1200 = vmul.f32 %v1072, 0.01
        %v1201 = vmul.f32 %v1073, 0.01
        %v1202 = vmul.f32 %v1074, 0.01
        %v1203 = vmul.f32 %v1075, 0.01
        %v1204 = vmul.f32 %v1076, 0.01
        %v1205 = vmul.f32 %v1077, 0.01
        %v1206 = vmul.f32 %v1078, 0.01
        %v1207 = vmul.f32 %v1079, 0.01
        %v1208 = vmul.f32 %v1080, 0.01
        %v1209 = vmul.f32 %v1081, 0.01
        %v1210 = vmul.f32 %v1082, 0.01
        %v1211 = vmul.f32 %v1083, 0.01
        %v1212 = vmul.f32 %v1084, 0.01
        %v1213 = vmul.f32 %v1085, 0.01
        %v1214 = vmul.f32 %v1086, 0.01
        %v1215 = vmul.f32 %v1087, 0.01
        %v1216 = vmul.f32 %v1088, 0.01
        %v1217 = vmul.f32 %v1089, 0.01
        %v1218 = vmul.f32 %v1090, 0.01
        %v1219 = vmul.f32 %v1091, 0.01
        %v1220 = vmul.f32 %v1092, 0.01
        %v1221 = vmul.f32 %v1093, 0.01
        %v1222 = vmul.f32 %v1094, 0.01
        %v1223 = vmul.f32 %v1095, 0.01
        %v1224 = vmul.f32 %v1096, 0.01
        %v1225 = vmul.f32 %v1097, 0.01
        %v1226 = vmul.f32 %v1098, 0.01
        %v1227 = vmul.f32 %v1099, 0.01
        %v1228 = vmul.f32 %v1100, 0.01
        %v1229 = vmul.f32 %v1101, 0.01
        %v1230 = vmul.f32 %v1102, 0.01
        %v1231 = vmul.f32 %v1103, 0.01
        %v1232 = vmul.f32 %v1104, 0.01
        %v1233 = vmul.f32 %v1105, 0.01
        %v1234 = vmul.f32 %v1106, 0.01
        %v1235 = vmul.f32 %v1107, 0.01
        %v1236 = vmul.f32 %v1108, 0.01
        %v1237 = vmul.f32 %v1109, 0.01
        %v1238 = vsel %vm1110, %v1046, %v1174
        %v1239 = vsel %vm1111, %v1047, %v1175
        %v1240 = vsel %vm1112, %v1048, %v1176
        %v1241 = vsel %vm1113, %v1049, %v1177
        %v1242 = vsel %vm1114, %v1050, %v1178
        %v1243 = vsel %vm1115, %v1051, %v1179
        %v1244 = vsel %vm1116, %v1052, %v1180
        %v1245 = vsel %vm1117, %v1053, %v1181
        %v1246 = vsel %vm1118, %v1054, %v1182
        %v1247 = vsel %vm1119, %v1055, %v1183
        %v1248 = vsel %vm1120, %v1056, %v1184
        %v1249 = vsel %vm1121, %v1057, %v1185
        %v1250 = vsel %vm1122, %v1058, %v1186
        %v1251 = vsel %vm1123, %v1059, %v1187
        %v1252 = vsel %vm1124, %v1060, %v1188
        %v1253 = vsel %vm1125, %v1061, %v1189
        %v1254 = vsel %vm1126, %v1062, %v1190
        %v1255 = vsel %vm1127, %v1063, %v1191
        %v1256 = vsel %vm1128, %v1064, %v1192
        %v1257 = vsel %vm1129, %v1065, %v1193
        %v1258 = vsel %vm1130, %v1066, %v1194
        %v1259 = vsel %vm1131, %v1067, %v1195
        %v1260 = vsel %vm1132, %v1068, %v1196
        %v1261 = vsel %vm1133, %v1069, %v1197
        %v1262 = vsel %vm1134, %v1070, %v1198
        %v1263 = vsel %vm1135, %v1071, %v1199
        %v1264 = vsel %vm1136, %v1072, %v1200
        %v1265 = vsel %vm1137, %v1073, %v1201
        %v1266 = vsel %vm1138, %v1074, %v1202
        %v1267 = vsel %vm1139, %v1075, %v1203
        %v1268 = vsel %vm1140, %v1076, %v1204
        %v1269 = vsel %vm1141, %v1077, %v1205
        %v1270 = vsel %vm1142, %v1078, %v1206
        %v1271 = vsel %vm1143, %v1079, %v1207
        %v1272 = vsel %vm1144, %v1080, %v1208
        %v1273 = vsel %vm1145, %v1081, %v1209
        %v1274 = vsel %vm1146, %v1082, %v1210
        %v1275 = vsel %vm1147, %v1083, %v1211
        %v1276 = vsel %vm1148, %v1084, %v1212
        %v1277 = vsel %vm1149, %v1085, %v1213
        %v1278 = vsel %vm1150, %v1086, %v1214
        %v1279 = vsel %vm1151, %v1087, %v1215
        %v1280 = vsel %vm1152, %v1088, %v1216
        %v1281 = vsel %vm1153, %v1089, %v1217
        %v1282 = vsel %vm1154, %v1090, %v1218
        %v1283 = vsel %vm1155, %v1091, %v1219
        %v1284 = vsel %vm1156, %v1092, %v1220
        %v1285 = vsel %vm1157, %v1093, %v1221
        %v1286 = vsel %vm1158, %v1094, %v1222
        %v1287 = vsel %vm1159, %v1095, %v1223
        %v1288 = vsel %vm1160, %v1096, %v1224
        %v1289 = vsel %vm1161, %v1097, %v1225
        %v1290 = vsel %vm1162, %v1098, %v1226
        %v1291 = vsel %vm1163, %v1099, %v1227
        %v1292 = vsel %vm1164, %v1100, %v1228
        %v1293 = vsel %vm1165, %v1101, %v1229
        %v1294 = vsel %vm1166, %v1102, %v1230
        %v1295 = vsel %vm1167, %v1103, %v1231
        %v1296 = vsel %vm1168, %v1104, %v1232
        %v1297 = vsel %vm1169, %v1105, %v1233
        %v1298 = vsel %vm1170, %v1106, %v1234
        %v1299 = vsel %vm1171, %v1107, %v1235
        %v1300 = vsel %vm1172, %v1108, %v1236
        %v1301 = vsel %vm1173, %v1109, %v1237
        %v1302 = vpack.c.bf16 %v1240, %v1238
        %v1303 = vpack.c.bf16 %v1241, %v1239
        %v1304 = vpack.c.bf16 %v1244, %v1242
        %v1305 = vpack.c.bf16 %v1245, %v1243
        %v1306 = vpack.c.bf16 %v1248, %v1246
        %v1307 = vpack.c.bf16 %v1249, %v1247
        %v1308 = vpack.c.bf16 %v1252, %v1250
        %v1309 = vpack.c.bf16 %v1253, %v1251
        %v1310 = vpack.c.bf16 %v1256, %v1254
        %v1311 = vpack.c.bf16 %v1257, %v1255
        %v1312 = vpack.c.bf16 %v1260, %v1258
        %v1313 = vpack.c.bf16 %v1261, %v1259
        %v1314 = vpack.c.bf16 %v1264, %v1262
        %v1315 = vpack.c.bf16 %v1265, %v1263
        %v1316 = vpack.c.bf16 %v1268, %v1266
        %v1317 = vpack.c.bf16 %v1269, %v1267
        %v1318 = vpack.c.bf16 %v1272, %v1270
        %v1319 = vpack.c.bf16 %v1273, %v1271
        %v1320 = vpack.c.bf16 %v1276, %v1274
        %v1321 = vpack.c.bf16 %v1277, %v1275
        %v1322 = vpack.c.bf16 %v1280, %v1278
        %v1323 = vpack.c.bf16 %v1281, %v1279
        %v1324 = vpack.c.bf16 %v1284, %v1282
        %v1325 = vpack.c.bf16 %v1285, %v1283
        %v1326 = vpack.c.bf16 %v1288, %v1286
        %v1327 = vpack.c.bf16 %v1289, %v1287
        %v1328 = vpack.c.bf16 %v1292, %v1290
        %v1329 = vpack.c.bf16 %v1293, %v1291
        %v1330 = vpack.c.bf16 %v1296, %v1294
        %v1331 = vpack.c.bf16 %v1297, %v1295
        %v1332 = vpack.c.bf16 %v1300, %v1298
        %v1333 = vpack.c.bf16 %v1301, %v1299
        %v1334 = vld [vmem:[%s5] sm:$0xff]
        %v1335 = vld [vmem:[%s5 + $0x8] sm:$0xff]
        %v1336 = vld [vmem:[%s5 + $0x10] sm:$0xff]
        %v1337 = vld [vmem:[%s5 + $0x18] sm:$0xff]
        %v1338 = vld [vmem:[%s5 + $0x20] sm:$0xff]
        %v1339 = vld [vmem:[%s5 + $0x28] sm:$0xff]
        %v1340 = vld [vmem:[%s5 + $0x30] sm:$0xff]
        %v1341 = vld [vmem:[%s5 + $0x38] sm:$0xff]
        %v1342 = vld [vmem:[%s5 + $0x40] sm:$0xff]
        %v1343 = vld [vmem:[%s5 + $0x48] sm:$0xff]
        %v1344 = vld [vmem:[%s5 + $0x50] sm:$0xff]
        %v1345 = vld [vmem:[%s5 + $0x58] sm:$0xff]
        %v1346 = vld [vmem:[%s5 + $0x60] sm:$0xff]
        %v1347 = vld [vmem:[%s5 + $0x68] sm:$0xff]
        %v1348 = vld [vmem:[%s5 + $0x70] sm:$0xff]
        %v1349 = vld [vmem:[%s5 + $0x78] sm:$0xff]
        %v1350 = vld [vmem:[%s5 + $0x80] sm:$0xff]
        %v1351 = vld [vmem:[%s5 + $0x88] sm:$0xff]
        %v1352 = vld [vmem:[%s5 + $0x90] sm:$0xff]
        %v1353 = vld [vmem:[%s5 + $0x98] sm:$0xff]
        %v1354 = vld [vmem:[%s5 + $0xa0] sm:$0xff]
        %v1355 = vld [vmem:[%s5 + $0xa8] sm:$0xff]
        %v1356 = vld [vmem:[%s5 + $0xb0] sm:$0xff]
        %v1357 = vld [vmem:[%s5 + $0xb8] sm:$0xff]
        %v1358 = vld [vmem:[%s5 + $0xc0] sm:$0xff]
        %v1359 = vld [vmem:[%s5 + $0xc8] sm:$0xff]
        %v1360 = vld [vmem:[%s5 + $0xd0] sm:$0xff]
        %v1361 = vld [vmem:[%s5 + $0xd8] sm:$0xff]
        %v1362 = vld [vmem:[%s5 + $0xe0] sm:$0xff]
        %v1363 = vld [vmem:[%s5 + $0xe8] sm:$0xff]
        %v1364 = vld [vmem:[%s5 + $0xf0] sm:$0xff]
        %v1365 = vld [vmem:[%s5 + $0xf8] sm:$0xff]
        %v1366 = vld [vmem:[%s5 + $0x100] sm:$0xff]
        %v1367 = vld [vmem:[%s5 + $0x108] sm:$0xff]
        %v1368 = vld [vmem:[%s5 + $0x110] sm:$0xff]
        %v1369 = vld [vmem:[%s5 + $0x118] sm:$0xff]
        %v1370 = vld [vmem:[%s5 + $0x120] sm:$0xff]
        %v1371 = vld [vmem:[%s5 + $0x128] sm:$0xff]
        %v1372 = vld [vmem:[%s5 + $0x130] sm:$0xff]
        %v1373 = vld [vmem:[%s5 + $0x138] sm:$0xff]
        %v1374 = vld [vmem:[%s5 + $0x140] sm:$0xff]
        %v1375 = vld [vmem:[%s5 + $0x148] sm:$0xff]
        %v1376 = vld [vmem:[%s5 + $0x150] sm:$0xff]
        %v1377 = vld [vmem:[%s5 + $0x158] sm:$0xff]
        %v1378 = vld [vmem:[%s5 + $0x160] sm:$0xff]
        %v1379 = vld [vmem:[%s5 + $0x168] sm:$0xff]
        %v1380 = vld [vmem:[%s5 + $0x170] sm:$0xff]
        %v1381 = vld [vmem:[%s5 + $0x178] sm:$0xff]
        %v1382 = vld [vmem:[%s5 + $0x180] sm:$0xff]
        %v1383 = vld [vmem:[%s5 + $0x188] sm:$0xff]
        %v1384 = vld [vmem:[%s5 + $0x190] sm:$0xff]
        %v1385 = vld [vmem:[%s5 + $0x198] sm:$0xff]
        %v1386 = vld [vmem:[%s5 + $0x1a0] sm:$0xff]
        %v1387 = vld [vmem:[%s5 + $0x1a8] sm:$0xff]
        %v1388 = vld [vmem:[%s5 + $0x1b0] sm:$0xff]
        %v1389 = vld [vmem:[%s5 + $0x1b8] sm:$0xff]
        %v1390 = vld [vmem:[%s5 + $0x1c0] sm:$0xff]
        %v1391 = vld [vmem:[%s5 + $0x1c8] sm:$0xff]
        %v1392 = vld [vmem:[%s5 + $0x1d0] sm:$0xff]
        %v1393 = vld [vmem:[%s5 + $0x1d8] sm:$0xff]
        %v1394 = vld [vmem:[%s5 + $0x1e0] sm:$0xff]
        %v1395 = vld [vmem:[%s5 + $0x1e8] sm:$0xff]
        %v1396 = vld [vmem:[%s5 + $0x1f0] sm:$0xff]
        %v1397 = vld [vmem:[%s5 + $0x1f8] sm:$0xff]
        %v1398 = vld [vmem:[%s6] sm:$0xf]
        %v1400 = vlaneseq
        %v1401 = vshrl.u32 %v1400, 7
        %v1402 = vsub.s32 0, %v1401
        %v1403 = vrot.slane %v1398, %v1402
        %v1404 = vlaneseq
        %v1405 = vshrl.u32 %v1404, 7
        %v1406 = vsub.s32 1, %v1405
        %v1407 = vrot.slane %v1398, %v1406
        %v1408 = vlaneseq
        %v1409 = vshrl.u32 %v1408, 7
        %v1410 = vsub.s32 2, %v1409
        %v1411 = vrot.slane %v1398, %v1410
        %v1412 = vlaneseq
        %v1413 = vshrl.u32 %v1412, 7
        %v1414 = vsub.s32 3, %v1413
        %v1415 = vrot.slane %v1398, %v1414
        %v1484 = vunpack.c.l.b16 %v1334
        %v1485 = vunpack.c.h.b16 %v1334
        %v1486 = vunpack.c.l.b16 %v1335
        %v1487 = vunpack.c.h.b16 %v1335
        %v1488 = vunpack.c.l.b16 %v1336
        %v1489 = vunpack.c.h.b16 %v1336
        %v1490 = vunpack.c.l.b16 %v1337
        %v1491 = vunpack.c.h.b16 %v1337
        %v1492 = vunpack.c.l.b16 %v1338
        %v1493 = vunpack.c.h.b16 %v1338
        %v1494 = vunpack.c.l.b16 %v1339
        %v1495 = vunpack.c.h.b16 %v1339
        %v1496 = vunpack.c.l.b16 %v1340
        %v1497 = vunpack.c.h.b16 %v1340
        %v1498 = vunpack.c.l.b16 %v1341
        %v1499 = vunpack.c.h.b16 %v1341
        %v1500 = vunpack.c.l.b16 %v1342
        %v1501 = vunpack.c.h.b16 %v1342
        %v1502 = vunpack.c.l.b16 %v1343
        %v1503 = vunpack.c.h.b16 %v1343
        %v1504 = vunpack.c.l.b16 %v1344
        %v1505 = vunpack.c.h.b16 %v1344
        %v1506 = vunpack.c.l.b16 %v1345
        %v1507 = vunpack.c.h.b16 %v1345
        %v1508 = vunpack.c.l.b16 %v1346
        %v1509 = vunpack.c.h.b16 %v1346
        %v1510 = vunpack.c.l.b16 %v1347
        %v1511 = vunpack.c.h.b16 %v1347
        %v1512 = vunpack.c.l.b16 %v1348
        %v1513 = vunpack.c.h.b16 %v1348
        %v1514 = vunpack.c.l.b16 %v1349
        %v1515 = vunpack.c.h.b16 %v1349
        %v1516 = vunpack.c.l.b16 %v1350
        %v1517 = vunpack.c.h.b16 %v1350
        %v1518 = vunpack.c.l.b16 %v1351
        %v1519 = vunpack.c.h.b16 %v1351
        %v1520 = vunpack.c.l.b16 %v1352
        %v1521 = vunpack.c.h.b16 %v1352
        %v1522 = vunpack.c.l.b16 %v1353
        %v1523 = vunpack.c.h.b16 %v1353
        %v1524 = vunpack.c.l.b16 %v1354
        %v1525 = vunpack.c.h.b16 %v1354
        %v1526 = vunpack.c.l.b16 %v1355
        %v1527 = vunpack.c.h.b16 %v1355
        %v1528 = vunpack.c.l.b16 %v1356
        %v1529 = vunpack.c.h.b16 %v1356
        %v1530 = vunpack.c.l.b16 %v1357
        %v1531 = vunpack.c.h.b16 %v1357
        %v1532 = vunpack.c.l.b16 %v1358
        %v1533 = vunpack.c.h.b16 %v1358
        %v1534 = vunpack.c.l.b16 %v1359
        %v1535 = vunpack.c.h.b16 %v1359
        %v1536 = vunpack.c.l.b16 %v1360
        %v1537 = vunpack.c.h.b16 %v1360
        %v1538 = vunpack.c.l.b16 %v1361
        %v1539 = vunpack.c.h.b16 %v1361
        %v1540 = vunpack.c.l.b16 %v1362
        %v1541 = vunpack.c.h.b16 %v1362
        %v1542 = vunpack.c.l.b16 %v1363
        %v1543 = vunpack.c.h.b16 %v1363
        %v1544 = vunpack.c.l.b16 %v1364
        %v1545 = vunpack.c.h.b16 %v1364
        %v1546 = vunpack.c.l.b16 %v1365
        %v1547 = vunpack.c.h.b16 %v1365
        %v1548 = vunpack.c.l.b16 %v1366
        %v1549 = vunpack.c.h.b16 %v1366
        %v1550 = vunpack.c.l.b16 %v1367
        %v1551 = vunpack.c.h.b16 %v1367
        %v1552 = vunpack.c.l.b16 %v1368
        %v1553 = vunpack.c.h.b16 %v1368
        %v1554 = vunpack.c.l.b16 %v1369
        %v1555 = vunpack.c.h.b16 %v1369
        %v1556 = vunpack.c.l.b16 %v1370
        %v1557 = vunpack.c.h.b16 %v1370
        %v1558 = vunpack.c.l.b16 %v1371
        %v1559 = vunpack.c.h.b16 %v1371
        %v1560 = vunpack.c.l.b16 %v1372
        %v1561 = vunpack.c.h.b16 %v1372
        %v1562 = vunpack.c.l.b16 %v1373
        %v1563 = vunpack.c.h.b16 %v1373
        %v1564 = vunpack.c.l.b16 %v1374
        %v1565 = vunpack.c.h.b16 %v1374
        %v1566 = vunpack.c.l.b16 %v1375
        %v1567 = vunpack.c.h.b16 %v1375
        %v1568 = vunpack.c.l.b16 %v1376
        %v1569 = vunpack.c.h.b16 %v1376
        %v1570 = vunpack.c.l.b16 %v1377
        %v1571 = vunpack.c.h.b16 %v1377
        %v1572 = vunpack.c.l.b16 %v1378
        %v1573 = vunpack.c.h.b16 %v1378
        %v1574 = vunpack.c.l.b16 %v1379
        %v1575 = vunpack.c.h.b16 %v1379
        %v1576 = vunpack.c.l.b16 %v1380
        %v1577 = vunpack.c.h.b16 %v1380
        %v1578 = vunpack.c.l.b16 %v1381
        %v1579 = vunpack.c.h.b16 %v1381
        %v1580 = vunpack.c.l.b16 %v1382
        %v1581 = vunpack.c.h.b16 %v1382
        %v1582 = vunpack.c.l.b16 %v1383
        %v1583 = vunpack.c.h.b16 %v1383
        %v1584 = vunpack.c.l.b16 %v1384
        %v1585 = vunpack.c.h.b16 %v1384
        %v1586 = vunpack.c.l.b16 %v1385
        %v1587 = vunpack.c.h.b16 %v1385
        %v1588 = vunpack.c.l.b16 %v1386
        %v1589 = vunpack.c.h.b16 %v1386
        %v1590 = vunpack.c.l.b16 %v1387
        %v1591 = vunpack.c.h.b16 %v1387
        %v1592 = vunpack.c.l.b16 %v1388
        %v1593 = vunpack.c.h.b16 %v1388
        %v1594 = vunpack.c.l.b16 %v1389
        %v1595 = vunpack.c.h.b16 %v1389
        %v1596 = vunpack.c.l.b16 %v1390
        %v1597 = vunpack.c.h.b16 %v1390
        %v1598 = vunpack.c.l.b16 %v1391
        %v1599 = vunpack.c.h.b16 %v1391
        %v1600 = vunpack.c.l.b16 %v1392
        %v1601 = vunpack.c.h.b16 %v1392
        %v1602 = vunpack.c.l.b16 %v1393
        %v1603 = vunpack.c.h.b16 %v1393
        %v1604 = vunpack.c.l.b16 %v1394
        %v1605 = vunpack.c.h.b16 %v1394
        %v1606 = vunpack.c.l.b16 %v1395
        %v1607 = vunpack.c.h.b16 %v1395
        %v1608 = vunpack.c.l.b16 %v1396
        %v1609 = vunpack.c.h.b16 %v1396
        %v1610 = vunpack.c.l.b16 %v1397
        %v1611 = vunpack.c.h.b16 %v1397
        %v1612 = vpack.c.b16 %v1488, %v1484
        %v1613 = vpack.c.b16 %v1489, %v1485
        %v1614 = vpack.c.b16 %v1490, %v1486
        %v1615 = vpack.c.b16 %v1491, %v1487
        %v1616 = vpack.c.b16 %v1496, %v1492
        %v1617 = vpack.c.b16 %v1497, %v1493
        %v1618 = vpack.c.b16 %v1498, %v1494
        %v1619 = vpack.c.b16 %v1499, %v1495
        %v1620 = vpack.c.b16 %v1504, %v1500
        %v1621 = vpack.c.b16 %v1505, %v1501
        %v1622 = vpack.c.b16 %v1506, %v1502
        %v1623 = vpack.c.b16 %v1507, %v1503
        %v1624 = vpack.c.b16 %v1512, %v1508
        %v1625 = vpack.c.b16 %v1513, %v1509
        %v1626 = vpack.c.b16 %v1514, %v1510
        %v1627 = vpack.c.b16 %v1515, %v1511
        %v1628 = vpack.c.b16 %v1520, %v1516
        %v1629 = vpack.c.b16 %v1521, %v1517
        %v1630 = vpack.c.b16 %v1522, %v1518
        %v1631 = vpack.c.b16 %v1523, %v1519
        %v1632 = vpack.c.b16 %v1528, %v1524
        %v1633 = vpack.c.b16 %v1529, %v1525
        %v1634 = vpack.c.b16 %v1530, %v1526
        %v1635 = vpack.c.b16 %v1531, %v1527
        %v1636 = vpack.c.b16 %v1536, %v1532
        %v1637 = vpack.c.b16 %v1537, %v1533
        %v1638 = vpack.c.b16 %v1538, %v1534
        %v1639 = vpack.c.b16 %v1539, %v1535
        %v1640 = vpack.c.b16 %v1544, %v1540
        %v1641 = vpack.c.b16 %v1545, %v1541
        %v1642 = vpack.c.b16 %v1546, %v1542
        %v1643 = vpack.c.b16 %v1547, %v1543
        %v1644 = vpack.c.b16 %v1552, %v1548
        %v1645 = vpack.c.b16 %v1553, %v1549
        %v1646 = vpack.c.b16 %v1554, %v1550
        %v1647 = vpack.c.b16 %v1555, %v1551
        %v1648 = vpack.c.b16 %v1560, %v1556
        %v1649 = vpack.c.b16 %v1561, %v1557
        %v1650 = vpack.c.b16 %v1562, %v1558
        %v1651 = vpack.c.b16 %v1563, %v1559
        %v1652 = vpack.c.b16 %v1568, %v1564
        %v1653 = vpack.c.b16 %v1569, %v1565
        %v1654 = vpack.c.b16 %v1570, %v1566
        %v1655 = vpack.c.b16 %v1571, %v1567
        %v1656 = vpack.c.b16 %v1576, %v1572
        %v1657 = vpack.c.b16 %v1577, %v1573
        %v1658 = vpack.c.b16 %v1578, %v1574
        %v1659 = vpack.c.b16 %v1579, %v1575
        %v1660 = vpack.c.b16 %v1584, %v1580
        %v1661 = vpack.c.b16 %v1585, %v1581
        %v1662 = vpack.c.b16 %v1586, %v1582
        %v1663 = vpack.c.b16 %v1587, %v1583
        %v1664 = vpack.c.b16 %v1592, %v1588
        %v1665 = vpack.c.b16 %v1593, %v1589
        %v1666 = vpack.c.b16 %v1594, %v1590
        %v1667 = vpack.c.b16 %v1595, %v1591
        %v1668 = vpack.c.b16 %v1600, %v1596
        %v1669 = vpack.c.b16 %v1601, %v1597
        %v1670 = vpack.c.b16 %v1602, %v1598
        %v1671 = vpack.c.b16 %v1603, %v1599
        %v1672 = vpack.c.b16 %v1608, %v1604
        %v1673 = vpack.c.b16 %v1609, %v1605
        %v1674 = vpack.c.b16 %v1610, %v1606
        %v1675 = vpack.c.b16 %v1611, %v1607
        %1740 = vmatprep.subr.bf16.mxu0 %v1641
        %1741 = vmatpush1.bf16.msra.mxu0 %v1640
        %1742 = vmatprep.subr.bf16.mxu0 %v1637
        %1743 = vmatpush1.bf16.msra.mxu0 %v1636
        %1744 = vmatprep.subr.bf16.mxu0 %v1633
        %1745 = vmatpush1.bf16.msra.mxu0 %v1632
        %1746 = vmatprep.subr.bf16.mxu0 %v1629
        %1747 = vmatpush1.bf16.msra.mxu0 %v1628
        %1748 = vmatprep.subr.bf16.mxu0 %v1625
        %1749 = vmatpush1.bf16.msra.mxu0 %v1624
        %1750 = vmatprep.subr.bf16.mxu0 %v1621
        %1751 = vmatpush1.bf16.msra.mxu0 %v1620
        %1752 = vmatprep.subr.bf16.mxu0 %v1617
        %1753 = vmatpush1.bf16.msra.mxu0 %v1616
        %1754 = vmatprep.subr.bf16.mxu0 %v1613
        %1755 = vmatpush1.bf16.msra.mxu0 %v1612
        %1756 = vmatprep.subr.bf16.mxu0 %v1673
        %1757 = vmatpush2.bf16.msra.mxu0 %v1672
        %1758 = vmatprep.subr.bf16.mxu0 %v1669
        %1759 = vmatpush2.bf16.msra.mxu0 %v1668
        %1760 = vmatprep.subr.bf16.mxu0 %v1665
        %1761 = vmatpush2.bf16.msra.mxu0 %v1664
        %1762 = vmatprep.subr.bf16.mxu0 %v1661
        %1763 = vmatpush2.bf16.msra.mxu0 %v1660
        %1764 = vmatprep.subr.bf16.mxu0 %v1657
        %1765 = vmatpush2.bf16.msra.mxu0 %v1656
        %1766 = vmatprep.subr.bf16.mxu0 %v1653
        %1767 = vmatpush2.bf16.msra.mxu0 %v1652
        %1768 = vmatprep.subr.bf16.mxu0 %v1649
        %1769 = vmatpush2.bf16.msra.mxu0 %v1648
        %1770 = vmatprep.subr.bf16.mxu0 %v1645
        %1771 = vmatpush2.bf16.msra.mxu0 %v1644
        %1772 = vmatprep.mubr.bf16.mxu0 %v1303
        %1773 = vmatmul.mubr.bf16.gmra.mxu0 %v1302
        %v1774 = vpop.f32.mrf.mxu0
        %v1775 = vadd.f32 %v1403, %v1774
        %v1776 = vpop.f32.mrf.mxu0
        %v1777 = vadd.f32 %v1407, %v1776
        %v1778 = vpop.f32.mrf.mxu0
        %v1779 = vadd.f32 %v1403, %v1778
        %v1780 = vpop.f32.mrf.mxu0
        %v1781 = vadd.f32 %v1407, %v1780
        %1782 = vmatprep.mubr.bf16.mxu0 %v1305
        %1783 = vmatmul.mubr.bf16.gmra.mxu0 %v1304
        %v1784 = vpop.f32.mrf.mxu0
        %v1785 = vadd.f32 %v1403, %v1784
        %v1786 = vpop.f32.mrf.mxu0
        %v1787 = vadd.f32 %v1407, %v1786
        %v1788 = vpop.f32.mrf.mxu0
        %v1789 = vadd.f32 %v1403, %v1788
        %v1790 = vpop.f32.mrf.mxu0
        %v1791 = vadd.f32 %v1407, %v1790
        %1792 = vmatprep.mubr.bf16.mxu0 %v1307
        %1793 = vmatmul.mubr.bf16.gmra.mxu0 %v1306
        %v1794 = vpop.f32.mrf.mxu0
        %v1795 = vadd.f32 %v1403, %v1794
        %v1796 = vpop.f32.mrf.mxu0
        %v1797 = vadd.f32 %v1407, %v1796
        %v1798 = vpop.f32.mrf.mxu0
        %v1799 = vadd.f32 %v1403, %v1798
        %v1800 = vpop.f32.mrf.mxu0
        %v1801 = vadd.f32 %v1407, %v1800
        %1802 = vmatprep.mubr.bf16.mxu0 %v1309
        %1803 = vmatmul.mubr.bf16.gmra.mxu0 %v1308
        %v1804 = vpop.f32.mrf.mxu0
        %v1805 = vadd.f32 %v1403, %v1804
        %v1806 = vpop.f32.mrf.mxu0
        %v1807 = vadd.f32 %v1407, %v1806
        %v1808 = vpop.f32.mrf.mxu0
        %v1809 = vadd.f32 %v1403, %v1808
        %v1810 = vpop.f32.mrf.mxu0
        %v1811 = vadd.f32 %v1407, %v1810
        %1812 = vmatprep.mubr.bf16.mxu0 %v1311
        %1813 = vmatmul.mubr.bf16.gmra.mxu0 %v1310
        %v1814 = vpop.f32.mrf.mxu0
        %v1815 = vadd.f32 %v1403, %v1814
        %v1816 = vpop.f32.mrf.mxu0
        %v1817 = vadd.f32 %v1407, %v1816
        %v1818 = vpop.f32.mrf.mxu0
        %v1819 = vadd.f32 %v1403, %v1818
        %v1820 = vpop.f32.mrf.mxu0
        %v1821 = vadd.f32 %v1407, %v1820
        %1822 = vmatprep.mubr.bf16.mxu0 %v1313
        %1823 = vmatmul.mubr.bf16.gmra.mxu0 %v1312
        %v1824 = vpop.f32.mrf.mxu0
        %v1825 = vadd.f32 %v1403, %v1824
        %v1826 = vpop.f32.mrf.mxu0
        %v1827 = vadd.f32 %v1407, %v1826
        %v1828 = vpop.f32.mrf.mxu0
        %v1829 = vadd.f32 %v1403, %v1828
        %v1830 = vpop.f32.mrf.mxu0
        %v1831 = vadd.f32 %v1407, %v1830
        %1832 = vmatprep.mubr.bf16.mxu0 %v1315
        %1833 = vmatmul.mubr.bf16.gmra.mxu0 %v1314
        %v1834 = vpop.f32.mrf.mxu0
        %v1835 = vadd.f32 %v1403, %v1834
        %v1836 = vpop.f32.mrf.mxu0
        %v1837 = vadd.f32 %v1407, %v1836
        %v1838 = vpop.f32.mrf.mxu0
        %v1839 = vadd.f32 %v1403, %v1838
        %v1840 = vpop.f32.mrf.mxu0
        %v1841 = vadd.f32 %v1407, %v1840
        %1842 = vmatprep.mubr.bf16.mxu0 %v1317
        %1843 = vmatmul.mubr.bf16.gmra.mxu0 %v1316
        %v1844 = vpop.f32.mrf.mxu0
        %v1845 = vadd.f32 %v1403, %v1844
        %v1846 = vpop.f32.mrf.mxu0
        %v1847 = vadd.f32 %v1407, %v1846
        %v1848 = vpop.f32.mrf.mxu0
        %v1849 = vadd.f32 %v1403, %v1848
        %v1850 = vpop.f32.mrf.mxu0
        %v1851 = vadd.f32 %v1407, %v1850
        %1852 = vmatprep.mubr.bf16.mxu0 %v1319
        %1853 = vmatmul.mubr.bf16.gmra.mxu0 %v1318
        %v1854 = vpop.f32.mrf.mxu0
        %v1855 = vadd.f32 %v1403, %v1854
        %v1856 = vpop.f32.mrf.mxu0
        %v1857 = vadd.f32 %v1407, %v1856
        %v1858 = vpop.f32.mrf.mxu0
        %v1859 = vadd.f32 %v1403, %v1858
        %v1860 = vpop.f32.mrf.mxu0
        %v1861 = vadd.f32 %v1407, %v1860
        %1862 = vmatprep.mubr.bf16.mxu0 %v1321
        %1863 = vmatmul.mubr.bf16.gmra.mxu0 %v1320
        %v1864 = vpop.f32.mrf.mxu0
        %v1865 = vadd.f32 %v1403, %v1864
        %v1866 = vpop.f32.mrf.mxu0
        %v1867 = vadd.f32 %v1407, %v1866
        %v1868 = vpop.f32.mrf.mxu0
        %v1869 = vadd.f32 %v1403, %v1868
        %v1870 = vpop.f32.mrf.mxu0
        %v1871 = vadd.f32 %v1407, %v1870
        %1872 = vmatprep.mubr.bf16.mxu0 %v1323
        %1873 = vmatmul.mubr.bf16.gmra.mxu0 %v1322
        %v1874 = vpop.f32.mrf.mxu0
        %v1875 = vadd.f32 %v1403, %v1874
        %v1876 = vpop.f32.mrf.mxu0
        %v1877 = vadd.f32 %v1407, %v1876
        %v1878 = vpop.f32.mrf.mxu0
        %v1879 = vadd.f32 %v1403, %v1878
        %v1880 = vpop.f32.mrf.mxu0
        %v1881 = vadd.f32 %v1407, %v1880
        %1882 = vmatprep.mubr.bf16.mxu0 %v1325
        %1883 = vmatmul.mubr.bf16.gmra.mxu0 %v1324
        %v1884 = vpop.f32.mrf.mxu0
        %v1885 = vadd.f32 %v1403, %v1884
        %v1886 = vpop.f32.mrf.mxu0
        %v1887 = vadd.f32 %v1407, %v1886
        %v1888 = vpop.f32.mrf.mxu0
        %v1889 = vadd.f32 %v1403, %v1888
        %v1890 = vpop.f32.mrf.mxu0
        %v1891 = vadd.f32 %v1407, %v1890
        %1892 = vmatprep.mubr.bf16.mxu0 %v1327
        %1893 = vmatmul.mubr.bf16.gmra.mxu0 %v1326
        %v1894 = vpop.f32.mrf.mxu0
        %v1895 = vadd.f32 %v1403, %v1894
        %v1896 = vpop.f32.mrf.mxu0
        %v1897 = vadd.f32 %v1407, %v1896
        %v1898 = vpop.f32.mrf.mxu0
        %v1899 = vadd.f32 %v1403, %v1898
        %v1900 = vpop.f32.mrf.mxu0
        %v1901 = vadd.f32 %v1407, %v1900
        %1902 = vmatprep.mubr.bf16.mxu0 %v1329
        %1903 = vmatmul.mubr.bf16.gmra.mxu0 %v1328
        %v1904 = vpop.f32.mrf.mxu0
        %v1905 = vadd.f32 %v1403, %v1904
        %v1906 = vpop.f32.mrf.mxu0
        %v1907 = vadd.f32 %v1407, %v1906
        %v1908 = vpop.f32.mrf.mxu0
        %v1909 = vadd.f32 %v1403, %v1908
        %v1910 = vpop.f32.mrf.mxu0
        %v1911 = vadd.f32 %v1407, %v1910
        %1912 = vmatprep.mubr.bf16.mxu0 %v1331
        %1913 = vmatmul.mubr.bf16.gmra.mxu0 %v1330
        %v1914 = vpop.f32.mrf.mxu0
        %v1915 = vadd.f32 %v1403, %v1914
        %v1916 = vpop.f32.mrf.mxu0
        %v1917 = vadd.f32 %v1407, %v1916
        %v1918 = vpop.f32.mrf.mxu0
        %v1919 = vadd.f32 %v1403, %v1918
        %v1920 = vpop.f32.mrf.mxu0
        %v1921 = vadd.f32 %v1407, %v1920
        %1922 = vmatprep.mubr.bf16.mxu0 %v1333
        %1923 = vmatmul.mubr.bf16.gmra.mxu0 %v1332
        %v1924 = vpop.f32.mrf.mxu0
        %v1925 = vadd.f32 %v1403, %v1924
        %v1926 = vpop.f32.mrf.mxu0
        %v1927 = vadd.f32 %v1407, %v1926
        %v1928 = vpop.f32.mrf.mxu0
        %v1929 = vadd.f32 %v1403, %v1928
        %v1930 = vpop.f32.mrf.mxu0
        %v1931 = vadd.f32 %v1407, %v1930
        %1932 = vdwg.mxu0
        %1933 = vmatprep.subr.bf16.mxu0 %v1643
        %1934 = vmatpush1.bf16.msra.mxu0 %v1642
        %1935 = vmatprep.subr.bf16.mxu0 %v1639
        %1936 = vmatpush1.bf16.msra.mxu0 %v1638
        %1937 = vmatprep.subr.bf16.mxu0 %v1635
        %1938 = vmatpush1.bf16.msra.mxu0 %v1634
        %1939 = vmatprep.subr.bf16.mxu0 %v1631
        %1940 = vmatpush1.bf16.msra.mxu0 %v1630
        %1941 = vmatprep.subr.bf16.mxu0 %v1627
        %1942 = vmatpush1.bf16.msra.mxu0 %v1626
        %1943 = vmatprep.subr.bf16.mxu0 %v1623
        %1944 = vmatpush1.bf16.msra.mxu0 %v1622
        %1945 = vmatprep.subr.bf16.mxu0 %v1619
        %1946 = vmatpush1.bf16.msra.mxu0 %v1618
        %1947 = vmatprep.subr.bf16.mxu0 %v1615
        %1948 = vmatpush1.bf16.msra.mxu0 %v1614
        %1949 = vmatprep.subr.bf16.mxu0 %v1675
        %1950 = vmatpush2.bf16.msra.mxu0 %v1674
        %1951 = vmatprep.subr.bf16.mxu0 %v1671
        %1952 = vmatpush2.bf16.msra.mxu0 %v1670
        %1953 = vmatprep.subr.bf16.mxu0 %v1667
        %1954 = vmatpush2.bf16.msra.mxu0 %v1666
        %1955 = vmatprep.subr.bf16.mxu0 %v1663
        %1956 = vmatpush2.bf16.msra.mxu0 %v1662
        %1957 = vmatprep.subr.bf16.mxu0 %v1659
        %1958 = vmatpush2.bf16.msra.mxu0 %v1658
        %1959 = vmatprep.subr.bf16.mxu0 %v1655
        %1960 = vmatpush2.bf16.msra.mxu0 %v1654
        %1961 = vmatprep.subr.bf16.mxu0 %v1651
        %1962 = vmatpush2.bf16.msra.mxu0 %v1650
        %1963 = vmatprep.subr.bf16.mxu0 %v1647
        %1964 = vmatpush2.bf16.msra.mxu0 %v1646
        %1965 = vmatprep.mubr.bf16.mxu0 %v1303
        %1966 = vmatmul.mubr.bf16.gmra.mxu0 %v1302
        %v1967 = vpop.f32.mrf.mxu0
        %v1968 = vadd.f32 %v1411, %v1967
        %v1969 = vpop.f32.mrf.mxu0
        %v1970 = vadd.f32 %v1415, %v1969
        %v1971 = vpop.f32.mrf.mxu0
        %v1972 = vadd.f32 %v1411, %v1971
        %v1973 = vpop.f32.mrf.mxu0
        %v1974 = vadd.f32 %v1415, %v1973
        %1975 = vmatprep.mubr.bf16.mxu0 %v1305
        %1976 = vmatmul.mubr.bf16.gmra.mxu0 %v1304
        %v1977 = vpop.f32.mrf.mxu0
        %v1978 = vadd.f32 %v1411, %v1977
        %v1979 = vpop.f32.mrf.mxu0
        %v1980 = vadd.f32 %v1415, %v1979
        %v1981 = vpop.f32.mrf.mxu0
        %v1982 = vadd.f32 %v1411, %v1981
        %v1983 = vpop.f32.mrf.mxu0
        %v1984 = vadd.f32 %v1415, %v1983
        %1985 = vmatprep.mubr.bf16.mxu0 %v1307
        %1986 = vmatmul.mubr.bf16.gmra.mxu0 %v1306
        %v1987 = vpop.f32.mrf.mxu0
        %v1988 = vadd.f32 %v1411, %v1987
        %v1989 = vpop.f32.mrf.mxu0
        %v1990 = vadd.f32 %v1415, %v1989
        %v1991 = vpop.f32.mrf.mxu0
        %v1992 = vadd.f32 %v1411, %v1991
        %v1993 = vpop.f32.mrf.mxu0
        %v1994 = vadd.f32 %v1415, %v1993
        %1995 = vmatprep.mubr.bf16.mxu0 %v1309
        %1996 = vmatmul.mubr.bf16.gmra.mxu0 %v1308
        %v1997 = vpop.f32.mrf.mxu0
        %v1998 = vadd.f32 %v1411, %v1997
        %v1999 = vpop.f32.mrf.mxu0
        %v2000 = vadd.f32 %v1415, %v1999
        %v2001 = vpop.f32.mrf.mxu0
        %v2002 = vadd.f32 %v1411, %v2001
        %v2003 = vpop.f32.mrf.mxu0
        %v2004 = vadd.f32 %v1415, %v2003
        %2005 = vmatprep.mubr.bf16.mxu0 %v1311
        %2006 = vmatmul.mubr.bf16.gmra.mxu0 %v1310
        %v2007 = vpop.f32.mrf.mxu0
        %v2008 = vadd.f32 %v1411, %v2007
        %v2009 = vpop.f32.mrf.mxu0
        %v2010 = vadd.f32 %v1415, %v2009
        %v2011 = vpop.f32.mrf.mxu0
        %v2012 = vadd.f32 %v1411, %v2011
        %v2013 = vpop.f32.mrf.mxu0
        %v2014 = vadd.f32 %v1415, %v2013
        %2015 = vmatprep.mubr.bf16.mxu0 %v1313
        %2016 = vmatmul.mubr.bf16.gmra.mxu0 %v1312
        %v2017 = vpop.f32.mrf.mxu0
        %v2018 = vadd.f32 %v1411, %v2017
        %v2019 = vpop.f32.mrf.mxu0
        %v2020 = vadd.f32 %v1415, %v2019
        %v2021 = vpop.f32.mrf.mxu0
        %v2022 = vadd.f32 %v1411, %v2021
        %v2023 = vpop.f32.mrf.mxu0
        %v2024 = vadd.f32 %v1415, %v2023
        %2025 = vmatprep.mubr.bf16.mxu0 %v1315
        %2026 = vmatmul.mubr.bf16.gmra.mxu0 %v1314
        %v2027 = vpop.f32.mrf.mxu0
        %v2028 = vadd.f32 %v1411, %v2027
        %v2029 = vpop.f32.mrf.mxu0
        %v2030 = vadd.f32 %v1415, %v2029
        %v2031 = vpop.f32.mrf.mxu0
        %v2032 = vadd.f32 %v1411, %v2031
        %v2033 = vpop.f32.mrf.mxu0
        %v2034 = vadd.f32 %v1415, %v2033
        %2035 = vmatprep.mubr.bf16.mxu0 %v1317
        %2036 = vmatmul.mubr.bf16.gmra.mxu0 %v1316
        %v2037 = vpop.f32.mrf.mxu0
        %v2038 = vadd.f32 %v1411, %v2037
        %v2039 = vpop.f32.mrf.mxu0
        %v2040 = vadd.f32 %v1415, %v2039
        %v2041 = vpop.f32.mrf.mxu0
        %v2042 = vadd.f32 %v1411, %v2041
        %v2043 = vpop.f32.mrf.mxu0
        %v2044 = vadd.f32 %v1415, %v2043
        %2045 = vmatprep.mubr.bf16.mxu0 %v1319
        %2046 = vmatmul.mubr.bf16.gmra.mxu0 %v1318
        %v2047 = vpop.f32.mrf.mxu0
        %v2048 = vadd.f32 %v1411, %v2047
        %v2049 = vpop.f32.mrf.mxu0
        %v2050 = vadd.f32 %v1415, %v2049
        %v2051 = vpop.f32.mrf.mxu0
        %v2052 = vadd.f32 %v1411, %v2051
        %v2053 = vpop.f32.mrf.mxu0
        %v2054 = vadd.f32 %v1415, %v2053
        %2055 = vmatprep.mubr.bf16.mxu0 %v1321
        %2056 = vmatmul.mubr.bf16.gmra.mxu0 %v1320
        %v2057 = vpop.f32.mrf.mxu0
        %v2058 = vadd.f32 %v1411, %v2057
        %v2059 = vpop.f32.mrf.mxu0
        %v2060 = vadd.f32 %v1415, %v2059
        %v2061 = vpop.f32.mrf.mxu0
        %v2062 = vadd.f32 %v1411, %v2061
        %v2063 = vpop.f32.mrf.mxu0
        %v2064 = vadd.f32 %v1415, %v2063
        %2065 = vmatprep.mubr.bf16.mxu0 %v1323
        %2066 = vmatmul.mubr.bf16.gmra.mxu0 %v1322
        %v2067 = vpop.f32.mrf.mxu0
        %v2068 = vadd.f32 %v1411, %v2067
        %v2069 = vpop.f32.mrf.mxu0
        %v2070 = vadd.f32 %v1415, %v2069
        %v2071 = vpop.f32.mrf.mxu0
        %v2072 = vadd.f32 %v1411, %v2071
        %v2073 = vpop.f32.mrf.mxu0
        %v2074 = vadd.f32 %v1415, %v2073
        %2075 = vmatprep.mubr.bf16.mxu0 %v1325
        %2076 = vmatmul.mubr.bf16.gmra.mxu0 %v1324
        %v2077 = vpop.f32.mrf.mxu0
        %v2078 = vadd.f32 %v1411, %v2077
        %v2079 = vpop.f32.mrf.mxu0
        %v2080 = vadd.f32 %v1415, %v2079
        %v2081 = vpop.f32.mrf.mxu0
        %v2082 = vadd.f32 %v1411, %v2081
        %v2083 = vpop.f32.mrf.mxu0
        %v2084 = vadd.f32 %v1415, %v2083
        %2085 = vmatprep.mubr.bf16.mxu0 %v1327
        %2086 = vmatmul.mubr.bf16.gmra.mxu0 %v1326
        %v2087 = vpop.f32.mrf.mxu0
        %v2088 = vadd.f32 %v1411, %v2087
        %v2089 = vpop.f32.mrf.mxu0
        %v2090 = vadd.f32 %v1415, %v2089
        %v2091 = vpop.f32.mrf.mxu0
        %v2092 = vadd.f32 %v1411, %v2091
        %v2093 = vpop.f32.mrf.mxu0
        %v2094 = vadd.f32 %v1415, %v2093
        %2095 = vmatprep.mubr.bf16.mxu0 %v1329
        %2096 = vmatmul.mubr.bf16.gmra.mxu0 %v1328
        %v2097 = vpop.f32.mrf.mxu0
        %v2098 = vadd.f32 %v1411, %v2097
        %v2099 = vpop.f32.mrf.mxu0
        %v2100 = vadd.f32 %v1415, %v2099
        %v2101 = vpop.f32.mrf.mxu0
        %v2102 = vadd.f32 %v1411, %v2101
        %v2103 = vpop.f32.mrf.mxu0
        %v2104 = vadd.f32 %v1415, %v2103
        %2105 = vmatprep.mubr.bf16.mxu0 %v1331
        %2106 = vmatmul.mubr.bf16.gmra.mxu0 %v1330
        %v2107 = vpop.f32.mrf.mxu0
        %v2108 = vadd.f32 %v1411, %v2107
        %v2109 = vpop.f32.mrf.mxu0
        %v2110 = vadd.f32 %v1415, %v2109
        %v2111 = vpop.f32.mrf.mxu0
        %v2112 = vadd.f32 %v1411, %v2111
        %v2113 = vpop.f32.mrf.mxu0
        %v2114 = vadd.f32 %v1415, %v2113
        %2115 = vmatprep.mubr.bf16.mxu0 %v1333
        %2116 = vmatmul.mubr.bf16.gmra.mxu0 %v1332
        %v2117 = vpop.f32.mrf.mxu0
        %v2118 = vadd.f32 %v1411, %v2117
        %v2119 = vpop.f32.mrf.mxu0
        %v2120 = vadd.f32 %v1415, %v2119
        %v2121 = vpop.f32.mrf.mxu0
        %v2122 = vadd.f32 %v1411, %v2121
        %v2123 = vpop.f32.mrf.mxu0
        %v2124 = vadd.f32 %v1415, %v2123
        %2125 = vdwg.mxu0
        %v2126 = vtanh.pop %v1775
        %v2127 = vtanh.pop %v1777
        %v2128 = vtanh.pop %v1968
        %v2129 = vtanh.pop %v1970
        %v2130 = vtanh.pop %v1779
        %v2131 = vtanh.pop %v1781
        %v2132 = vtanh.pop %v1972
        %v2133 = vtanh.pop %v1974
        %v2134 = vtanh.pop %v1785
        %v2135 = vtanh.pop %v1787
        %v2136 = vtanh.pop %v1978
        %v2137 = vtanh.pop %v1980
        %v2138 = vtanh.pop %v1789
        %v2139 = vtanh.pop %v1791
        %v2140 = vtanh.pop %v1982
        %v2141 = vtanh.pop %v1984
        %v2142 = vtanh.pop %v1795
        %v2143 = vtanh.pop %v1797
        %v2144 = vtanh.pop %v1988
        %v2145 = vtanh.pop %v1990
        %v2146 = vtanh.pop %v1799
        %v2147 = vtanh.pop %v1801
        %v2148 = vtanh.pop %v1992
        %v2149 = vtanh.pop %v1994
        %v2150 = vtanh.pop %v1805
        %v2151 = vtanh.pop %v1807
        %v2152 = vtanh.pop %v1998
        %v2153 = vtanh.pop %v2000
        %v2154 = vtanh.pop %v1809
        %v2155 = vtanh.pop %v1811
        %v2156 = vtanh.pop %v2002
        %v2157 = vtanh.pop %v2004
        %v2158 = vtanh.pop %v1815
        %v2159 = vtanh.pop %v1817
        %v2160 = vtanh.pop %v2008
        %v2161 = vtanh.pop %v2010
        %v2162 = vtanh.pop %v1819
        %v2163 = vtanh.pop %v1821
        %v2164 = vtanh.pop %v2012
        %v2165 = vtanh.pop %v2014
        %v2166 = vtanh.pop %v1825
        %v2167 = vtanh.pop %v1827
        %v2168 = vtanh.pop %v2018
        %v2169 = vtanh.pop %v2020
        %v2170 = vtanh.pop %v1829
        %v2171 = vtanh.pop %v1831
        %v2172 = vtanh.pop %v2022
        %v2173 = vtanh.pop %v2024
        %v2174 = vtanh.pop %v1835
        %v2175 = vtanh.pop %v1837
        %v2176 = vtanh.pop %v2028
        %v2177 = vtanh.pop %v2030
        %v2178 = vtanh.pop %v1839
        %v2179 = vtanh.pop %v1841
        %v2180 = vtanh.pop %v2032
        %v2181 = vtanh.pop %v2034
        %v2182 = vtanh.pop %v1845
        %v2183 = vtanh.pop %v1847
        %v2184 = vtanh.pop %v2038
        %v2185 = vtanh.pop %v2040
        %v2186 = vtanh.pop %v1849
        %v2187 = vtanh.pop %v1851
        %v2188 = vtanh.pop %v2042
        %v2189 = vtanh.pop %v2044
        %v2190 = vtanh.pop %v1855
        %v2191 = vtanh.pop %v1857
        %v2192 = vtanh.pop %v2048
        %v2193 = vtanh.pop %v2050
        %v2194 = vtanh.pop %v1859
        %v2195 = vtanh.pop %v1861
        %v2196 = vtanh.pop %v2052
        %v2197 = vtanh.pop %v2054
        %v2198 = vtanh.pop %v1865
        %v2199 = vtanh.pop %v1867
        %v2200 = vtanh.pop %v2058
        %v2201 = vtanh.pop %v2060
        %v2202 = vtanh.pop %v1869
        %v2203 = vtanh.pop %v1871
        %v2204 = vtanh.pop %v2062
        %v2205 = vtanh.pop %v2064
        %v2206 = vtanh.pop %v1875
        %v2207 = vtanh.pop %v1877
        %v2208 = vtanh.pop %v2068
        %v2209 = vtanh.pop %v2070
        %v2210 = vtanh.pop %v1879
        %v2211 = vtanh.pop %v1881
        %v2212 = vtanh.pop %v2072
        %v2213 = vtanh.pop %v2074
        %v2214 = vtanh.pop %v1885
        %v2215 = vtanh.pop %v1887
        %v2216 = vtanh.pop %v2078
        %v2217 = vtanh.pop %v2080
        %v2218 = vtanh.pop %v1889
        %v2219 = vtanh.pop %v1891
        %v2220 = vtanh.pop %v2082
        %v2221 = vtanh.pop %v2084
        %v2222 = vtanh.pop %v1895
        %v2223 = vtanh.pop %v1897
        %v2224 = vtanh.pop %v2088
        %v2225 = vtanh.pop %v2090
        %v2226 = vtanh.pop %v1899
        %v2227 = vtanh.pop %v1901
        %v2228 = vtanh.pop %v2092
        %v2229 = vtanh.pop %v2094
        %v2230 = vtanh.pop %v1905
        %v2231 = vtanh.pop %v1907
        %v2232 = vtanh.pop %v2098
        %v2233 = vtanh.pop %v2100
        %v2234 = vtanh.pop %v1909
        %v2235 = vtanh.pop %v1911
        %v2236 = vtanh.pop %v2102
        %v2237 = vtanh.pop %v2104
        %v2238 = vtanh.pop %v1915
        %v2239 = vtanh.pop %v1917
        %v2240 = vtanh.pop %v2108
        %v2241 = vtanh.pop %v2110
        %v2242 = vtanh.pop %v1919
        %v2243 = vtanh.pop %v1921
        %v2244 = vtanh.pop %v2112
        %v2245 = vtanh.pop %v2114
        %v2246 = vtanh.pop %v1925
        %v2247 = vtanh.pop %v1927
        %v2248 = vtanh.pop %v2118
        %v2249 = vtanh.pop %v2120
        %v2250 = vtanh.pop %v1929
        %v2251 = vtanh.pop %v1931
        %v2252 = vtanh.pop %v2122
        %v2253 = vtanh.pop %v2124
        %2254 = vst [vmem:[%s288] sm:$0xff] %v2126
        %2255 = vst [vmem:[%s288 + $0x8] sm:$0xff] %v2127
        %2256 = vst [vmem:[%s288 + $0x10] sm:$0xff] %v2128
        %2257 = vst [vmem:[%s288 + $0x18] sm:$0xff] %v2129
        %2258 = vst [vmem:[%s288 + $0x20] sm:$0xff] %v2130
        %2259 = vst [vmem:[%s288 + $0x28] sm:$0xff] %v2131
        %2260 = vst [vmem:[%s288 + $0x30] sm:$0xff] %v2132
        %2261 = vst [vmem:[%s288 + $0x38] sm:$0xff] %v2133
        %2262 = vst [vmem:[%s288 + $0x40] sm:$0xff] %v2134
        %2263 = vst [vmem:[%s288 + $0x48] sm:$0xff] %v2135
        %2264 = vst [vmem:[%s288 + $0x50] sm:$0xff] %v2136
        %2265 = vst [vmem:[%s288 + $0x58] sm:$0xff] %v2137
        %2266 = vst [vmem:[%s288 + $0x60] sm:$0xff] %v2138
        %2267 = vst [vmem:[%s288 + $0x68] sm:$0xff] %v2139
        %2268 = vst [vmem:[%s288 + $0x70] sm:$0xff] %v2140
        %2269 = vst [vmem:[%s288 + $0x78] sm:$0xff] %v2141
        %2270 = vst [vmem:[%s288 + $0x80] sm:$0xff] %v2142
        %2271 = vst [vmem:[%s288 + $0x88] sm:$0xff] %v2143
        %2272 = vst [vmem:[%s288 + $0x90] sm:$0xff] %v2144
        %2273 = vst [vmem:[%s288 + $0x98] sm:$0xff] %v2145
        %2274 = vst [vmem:[%s288 + $0xa0] sm:$0xff] %v2146
        %2275 = vst [vmem:[%s288 + $0xa8] sm:$0xff] %v2147
        %2276 = vst [vmem:[%s288 + $0xb0] sm:$0xff] %v2148
        %2277 = vst [vmem:[%s288 + $0xb8] sm:$0xff] %v2149
        %2278 = vst [vmem:[%s288 + $0xc0] sm:$0xff] %v2150
        %2279 = vst [vmem:[%s288 + $0xc8] sm:$0xff] %v2151
        %2280 = vst [vmem:[%s288 + $0xd0] sm:$0xff] %v2152
        %2281 = vst [vmem:[%s288 + $0xd8] sm:$0xff] %v2153
        %2282 = vst [vmem:[%s288 + $0xe0] sm:$0xff] %v2154
        %2283 = vst [vmem:[%s288 + $0xe8] sm:$0xff] %v2155
        %2284 = vst [vmem:[%s288 + $0xf0] sm:$0xff] %v2156
        %2285 = vst [vmem:[%s288 + $0xf8] sm:$0xff] %v2157
        %2286 = vst [vmem:[%s288 + $0x100] sm:$0xff] %v2158
        %2287 = vst [vmem:[%s288 + $0x108] sm:$0xff] %v2159
        %2288 = vst [vmem:[%s288 + $0x110] sm:$0xff] %v2160
        %2289 = vst [vmem:[%s288 + $0x118] sm:$0xff] %v2161
        %2290 = vst [vmem:[%s288 + $0x120] sm:$0xff] %v2162
        %2291 = vst [vmem:[%s288 + $0x128] sm:$0xff] %v2163
        %2292 = vst [vmem:[%s288 + $0x130] sm:$0xff] %v2164
        %2293 = vst [vmem:[%s288 + $0x138] sm:$0xff] %v2165
        %2294 = vst [vmem:[%s288 + $0x140] sm:$0xff] %v2166
        %2295 = vst [vmem:[%s288 + $0x148] sm:$0xff] %v2167
        %2296 = vst [vmem:[%s288 + $0x150] sm:$0xff] %v2168
        %2297 = vst [vmem:[%s288 + $0x158] sm:$0xff] %v2169
        %2298 = vst [vmem:[%s288 + $0x160] sm:$0xff] %v2170
        %2299 = vst [vmem:[%s288 + $0x168] sm:$0xff] %v2171
        %2300 = vst [vmem:[%s288 + $0x170] sm:$0xff] %v2172
        %2301 = vst [vmem:[%s288 + $0x178] sm:$0xff] %v2173
        %2302 = vst [vmem:[%s288 + $0x180] sm:$0xff] %v2174
        %2303 = vst [vmem:[%s288 + $0x188] sm:$0xff] %v2175
        %2304 = vst [vmem:[%s288 + $0x190] sm:$0xff] %v2176
        %2305 = vst [vmem:[%s288 + $0x198] sm:$0xff] %v2177
        %2306 = vst [vmem:[%s288 + $0x1a0] sm:$0xff] %v2178
        %2307 = vst [vmem:[%s288 + $0x1a8] sm:$0xff] %v2179
        %2308 = vst [vmem:[%s288 + $0x1b0] sm:$0xff] %v2180
        %2309 = vst [vmem:[%s288 + $0x1b8] sm:$0xff] %v2181
        %2310 = vst [vmem:[%s288 + $0x1c0] sm:$0xff] %v2182
        %2311 = vst [vmem:[%s288 + $0x1c8] sm:$0xff] %v2183
        %2312 = vst [vmem:[%s288 + $0x1d0] sm:$0xff] %v2184
        %2313 = vst [vmem:[%s288 + $0x1d8] sm:$0xff] %v2185
        %2314 = vst [vmem:[%s288 + $0x1e0] sm:$0xff] %v2186
        %2315 = vst [vmem:[%s288 + $0x1e8] sm:$0xff] %v2187
        %2316 = vst [vmem:[%s288 + $0x1f0] sm:$0xff] %v2188
        %2317 = vst [vmem:[%s288 + $0x1f8] sm:$0xff] %v2189
        %2318 = vst [vmem:[%s288 + $0x200] sm:$0xff] %v2190
        %2319 = vst [vmem:[%s288 + $0x208] sm:$0xff] %v2191
        %2320 = vst [vmem:[%s288 + $0x210] sm:$0xff] %v2192
        %2321 = vst [vmem:[%s288 + $0x218] sm:$0xff] %v2193
        %2322 = vst [vmem:[%s288 + $0x220] sm:$0xff] %v2194
        %2323 = vst [vmem:[%s288 + $0x228] sm:$0xff] %v2195
        %2324 = vst [vmem:[%s288 + $0x230] sm:$0xff] %v2196
        %2325 = vst [vmem:[%s288 + $0x238] sm:$0xff] %v2197
        %2326 = vst [vmem:[%s288 + $0x240] sm:$0xff] %v2198
        %2327 = vst [vmem:[%s288 + $0x248] sm:$0xff] %v2199
        %2328 = vst [vmem:[%s288 + $0x250] sm:$0xff] %v2200
        %2329 = vst [vmem:[%s288 + $0x258] sm:$0xff] %v2201
        %2330 = vst [vmem:[%s288 + $0x260] sm:$0xff] %v2202
        %2331 = vst [vmem:[%s288 + $0x268] sm:$0xff] %v2203
        %2332 = vst [vmem:[%s288 + $0x270] sm:$0xff] %v2204
        %2333 = vst [vmem:[%s288 + $0x278] sm:$0xff] %v2205
        %2334 = vst [vmem:[%s288 + $0x280] sm:$0xff] %v2206
        %2335 = vst [vmem:[%s288 + $0x288] sm:$0xff] %v2207
        %2336 = vst [vmem:[%s288 + $0x290] sm:$0xff] %v2208
        %2337 = vst [vmem:[%s288 + $0x298] sm:$0xff] %v2209
        %2338 = vst [vmem:[%s288 + $0x2a0] sm:$0xff] %v2210
        %2339 = vst [vmem:[%s288 + $0x2a8] sm:$0xff] %v2211
        %2340 = vst [vmem:[%s288 + $0x2b0] sm:$0xff] %v2212
        %2341 = vst [vmem:[%s288 + $0x2b8] sm:$0xff] %v2213
        %2342 = vst [vmem:[%s288 + $0x2c0] sm:$0xff] %v2214
        %2343 = vst [vmem:[%s288 + $0x2c8] sm:$0xff] %v2215
        %2344 = vst [vmem:[%s288 + $0x2d0] sm:$0xff] %v2216
        %2345 = vst [vmem:[%s288 + $0x2d8] sm:$0xff] %v2217
        %2346 = vst [vmem:[%s288 + $0x2e0] sm:$0xff] %v2218
        %2347 = vst [vmem:[%s288 + $0x2e8] sm:$0xff] %v2219
        %2348 = vst [vmem:[%s288 + $0x2f0] sm:$0xff] %v2220
        %2349 = vst [vmem:[%s288 + $0x2f8] sm:$0xff] %v2221
        %2350 = vst [vmem:[%s288 + $0x300] sm:$0xff] %v2222
        %2351 = vst [vmem:[%s288 + $0x308] sm:$0xff] %v2223
        %2352 = vst [vmem:[%s288 + $0x310] sm:$0xff] %v2224
        %2353 = vst [vmem:[%s288 + $0x318] sm:$0xff] %v2225
        %2354 = vst [vmem:[%s288 + $0x320] sm:$0xff] %v2226
        %2355 = vst [vmem:[%s288 + $0x328] sm:$0xff] %v2227
        %2356 = vst [vmem:[%s288 + $0x330] sm:$0xff] %v2228
        %2357 = vst [vmem:[%s288 + $0x338] sm:$0xff] %v2229
        %2358 = vst [vmem:[%s288 + $0x340] sm:$0xff] %v2230
        %2359 = vst [vmem:[%s288 + $0x348] sm:$0xff] %v2231
        %2360 = vst [vmem:[%s288 + $0x350] sm:$0xff] %v2232
        %2361 = vst [vmem:[%s288 + $0x358] sm:$0xff] %v2233
        %2362 = vst [vmem:[%s288 + $0x360] sm:$0xff] %v2234
        %2363 = vst [vmem:[%s288 + $0x368] sm:$0xff] %v2235
        %2364 = vst [vmem:[%s288 + $0x370] sm:$0xff] %v2236
        %2365 = vst [vmem:[%s288 + $0x378] sm:$0xff] %v2237
        %2366 = vst [vmem:[%s288 + $0x380] sm:$0xff] %v2238
        %2367 = vst [vmem:[%s288 + $0x388] sm:$0xff] %v2239
        %2368 = vst [vmem:[%s288 + $0x390] sm:$0xff] %v2240
        %2369 = vst [vmem:[%s288 + $0x398] sm:$0xff] %v2241
        %2370 = vst [vmem:[%s288 + $0x3a0] sm:$0xff] %v2242
        %2371 = vst [vmem:[%s288 + $0x3a8] sm:$0xff] %v2243
        %2372 = vst [vmem:[%s288 + $0x3b0] sm:$0xff] %v2244
        %2373 = vst [vmem:[%s288 + $0x3b8] sm:$0xff] %v2245
        %2374 = vst [vmem:[%s288 + $0x3c0] sm:$0xff] %v2246
        %2375 = vst [vmem:[%s288 + $0x3c8] sm:$0xff] %v2247
        %2376 = vst [vmem:[%s288 + $0x3d0] sm:$0xff] %v2248
        %2377 = vst [vmem:[%s288 + $0x3d8] sm:$0xff] %v2249
        %2378 = vst [vmem:[%s288 + $0x3e0] sm:$0xff] %v2250
        %2379 = vst [vmem:[%s288 + $0x3e8] sm:$0xff] %v2251
        %2380 = vst [vmem:[%s288 + $0x3f0] sm:$0xff] %v2252
        %2381 = vst [vmem:[%s288 + $0x3f8] sm:$0xff] %v2253
        %s2382 = sand.u32 %s186, 1
        %s2383 = scalar_lea.sflag [#allocation3], %s2382
        %s2384 = sand.u32 %s186, 1
        %s2385 = smul.addr %s2384, 1024
        %s2386 = scalar_lea.vmem [#allocation2], %s2385
        // Predicated region
        $region49: #{netG_att_forward.1} parent=47 // pred_check
          %p2387 = pneg %p196
        $region50: #{netG_att_forward.1} parent=47 // pred_check_branch
          %2389 = sbr.rel (%p2387) target = $region52
        $region51: #{netG_att_forward.1} parent=47 // pred_region
          %s2390 = smul.u32 32, %s21
          %s2392 = ssub.s32 16384, 16384
          %2393 = vsyncadd %s2383, %s2392
          %s2394 = smul.addr %s2390, 4
          %s2395 = smul.addr %s2394, 128
          %s2396 = scalar_lea.hbm %s7, %s2395
          %s2397 = sshll.u32 %s2386, 4
          %s2398 = int_to_ptr.vmem [resolvable:$true] %s2397
          %2403 = dma.vmem_to_hbm [thread:$0]  %s2398, 16384, %s2396, %s2383, 512, 512, 32
        $region52: #{netG_att_forward.1} parent=47 // pred_fallthru
          _
      $region48: #{netG_att_forward.1} parent=5 // pred_fallthru
        _
      %p2404 = scmp.le.s32.totalorder 2, %s16
      // Predicated region
      $region53: #{netG_att_forward.1} parent=5 // pred_check
        %p2405 = pneg %p2404
      $region54: #{netG_att_forward.1} parent=5 // pred_check_branch
        %2407 = sbr.rel (%p2405) target = $region56
      $region55: #{netG_att_forward.1} parent=5 // pred_region
        %s2408 = ssub.s32 %s16, 2
        // Predicated region
        $region57: #{netG_att_forward.1} parent=55 // pred_check
          %p2409 = pneg %p202
        $region58: #{netG_att_forward.1} parent=55 // pred_check_branch
          %2411 = sbr.rel (%p2409) target = $region60
        $region59: #{netG_att_forward.1} parent=55 // pred_region
          %s2412 = sand.u32 %s187, 1
          %s2413 = scalar_lea.sflag [#allocation3], %s2412
          %s2414 = sand.u32 %s187, 1
          %s2415 = smul.addr %s2414, 1024
          %s2416 = scalar_lea.vmem [#allocation2], %s2415
          %2417 = dma.done %s2413, 16384
        $region60: #{netG_att_forward.1} parent=55 // pred_fallthru
          _
      $region56: #{netG_att_forward.1} parent=5 // pred_fallthru
        _
    $region6: #{netG_att_forward.1} parent=1 // loop_footer
      %s20 = sadd.s32 1, %s16
    $region7: #{netG_att_forward.1} parent=1 // loop_footer_branch
      %15 = sbr.rel target = $region3
    $region8: #{netG_att_forward.1} parent=1 // loop_exit
      _
    %2418 = vsyncpa [#allocation3], 1
    %s2419 = scalar_lea.sflag [#allocation3], 1
    %2420 = vsyncpa %s2419, 1

</llo_original>
